<compile_context>
chip_gen: v5e
topology: v5e:2x2
jax: 0.10.0
libtpu: 0.0.40
codegen_flags: <defaults>
</compile_context>

<pallas_src>
import functools

import jax
import jax.numpy as jnp
from jax.experimental import pallas as pl
from jax.experimental.pallas import tpu as pltpu


def _round_up(x, m):
    return -(-x // m) * m


def _sign_mlp_kernel(x_ref, w1_ref, b1_ref, w2_ref, b2_ref, out_ref):
    # x_ref : [tm, K*Fin]   (bf16) one contiguous row tile of the concatenated inputs
    # w1_ref: [K*Fin, K*H]  (bf16) block-diagonal first-layer weight
    # b1_ref: [1, K*H]      (f32)  concatenated first-layer bias
    # w2_ref: [K*H, C]      (bf16) final-layer weight
    # b2_ref: [1, C]        (f32)  final-layer bias
    # out_ref:[tm, C]       (f32)  log-probabilities
    h = jnp.dot(x_ref[...], w1_ref[...], preferred_element_type=jnp.float32)
    h = jnp.maximum(h + b1_ref[...], 0.0)                 # bias + ReLU in f32
    # TODO(synk): dropout(p=0.5) is only active in training mode; inference => identity.
    logits = jnp.dot(h.astype(w2_ref.dtype), w2_ref[...],
                     preferred_element_type=jnp.float32)
    logits = logits + b2_ref[...]                         # b2 added once, on final logits

    # numerically-stable log_softmax over the last dim
    m = jnp.max(logits, axis=-1, keepdims=True)
    shifted = logits - m
    lse = jnp.log(jnp.sum(jnp.exp(shifted), axis=-1, keepdims=True))
    out_ref[...] = (shifted - lse).astype(out_ref.dtype)


def sign_mlp_forward(xs_stacked, w1, b1, w2, b2, *,
                     tile_m=512, compute_dtype=jnp.bfloat16):
    """Fused SIGN-MLP forward.

    xs_stacked: [K, N, Fin]   stacked branch inputs (f32)
    w1:         [K, Fin, H]   per-branch Linear weights (pre-transposed)
    b1:         [K, H]
    w2:         [K, H, C]     final Linear weight, reshaped/split per branch
    b2:         [C]
    returns     [N, C] f32 log-probabilities
    """
    K, N, Fin = xs_stacked.shape
    H = w1.shape[-1]
    C = w2.shape[-1]
    KFin = K * Fin
    KH = K * H

    # ---- wrapper-side layout plumbing (lane-dense, single slab per tile) ----
    # [K, N, Fin] -> [N, K*Fin]: branch k occupies columns [k*Fin, (k+1)*Fin)
    x_cat = jnp.transpose(xs_stacked, (1, 0, 2)).reshape(N, KFin)

    # block-diagonal first-layer weight [K*Fin, K*H] (off-blocks are exact zeros)
    w1_bd = jnp.zeros((KFin, KH), dtype=w1.dtype)
    for k in range(K):
        w1_bd = w1_bd.at[k * Fin:(k + 1) * Fin, k * H:(k + 1) * H].set(w1[k])
    b1_cat = b1.reshape(1, KH).astype(jnp.float32)         # branch order matches blocks
    w2_full = w2.reshape(KH, C)                            # rows k*H+j == w2[k, j, :]
    b2_2d = b2.reshape(1, C).astype(jnp.float32)

    # bf16 feed to the MXU (f32 accumulation inside the kernel)
    x_cat = x_cat.astype(compute_dtype)
    w1_bd = w1_bd.astype(compute_dtype)
    w2_full = w2_full.astype(compute_dtype)
    elt = jnp.dtype(compute_dtype).itemsize

    # ---- tiling: big row tiles, multiple of 16, >=2 grid steps (v7x megacore) ----
    tile_m = max(16, _round_up(tile_m, 16))
    if N > 16 and pl.cdiv(N, tile_m) < 2:
        tile_m = max(16, _round_up(pl.cdiv(N, 2), 16))
    grid_m = pl.cdiv(N, tile_m)
    n_pad = grid_m * tile_m
    if n_pad != N:
        x_cat = jnp.pad(x_cat, ((0, n_pad - N), (0, 0)))   # padded rows are harmless

    # ---- VMEM budget (double-buffered xs/out tiles + resident weights) ----
    vmem_need = (2 * tile_m * KFin * elt            # xs tile, double buffered
                 + 2 * tile_m * C * 4               # output tile, double buffered
                 + 2 * (KFin * KH + KH * C) * elt   # weights (conservatively x2)
                 + 2 * (KH + C) * 4)                # biases
    vmem_limit = int(min(max(int(vmem_need * 1.25) + (2 << 20), 16 << 20), 48 << 20))

    cost = pl.CostEstimate(
        flops=2 * n_pad * (KFin * KH + KH * C),
        transcendentals=n_pad * C,                  # exp in log_softmax
        bytes_accessed=(n_pad * KFin * elt + n_pad * C * 4
                        + (KFin * KH + KH * C) * elt + (KH + C) * 4),
    )

    out_padded = pl.pallas_call(
        _sign_mlp_kernel,
        out_shape=jax.ShapeDtypeStruct((n_pad, C), jnp.float32),
        grid_spec=pltpu.PrefetchScalarGridSpec(
            num_scalar_prefetch=0,
            grid=(grid_m,),
            in_specs=[
                # NOTE: for v5e at very large tiles, pipeline_mode=pl.Buffered(3)
                # on this xs spec can hide extra DMA latency.
                pl.BlockSpec((tile_m, KFin), lambda i: (i, 0)),
                pl.BlockSpec((KFin, KH), lambda i: (0, 0)),
                pl.BlockSpec((1, KH), lambda i: (0, 0)),
                pl.BlockSpec((KH, C), lambda i: (0, 0)),
                pl.BlockSpec((1, C), lambda i: (0, 0)),
            ],
            out_specs=pl.BlockSpec((tile_m, C), lambda i: (i, 0)),
        ),
        compiler_params=pltpu.CompilerParams(
            dimension_semantics=("parallel",),
            vmem_limit_bytes=vmem_limit,
        ),
        cost_estimate=cost,
    )(x_cat, w1_bd, b1_cat, w2_full, b2_2d)

    return out_padded[:N]


# --------------------------- references (for checking) ---------------------------

def _reference_f32(xs_stacked, w1, b1, w2, b2):
    # plain-JAX f32 reference mirroring the PyTorch forward (eval mode)
    K = xs_stacked.shape[0]
    hs = [jnp.maximum(xs_stacked[k] @ w1[k] + b1[k], 0.0) for k in range(K)]
    x = jnp.concatenate(hs, axis=-1)                       # [N, K*H]
    w_full = w2.reshape(-1, w2.shape[-1])                  # [K*H, C]
    logits = x @ w_full + b2
    return jax.nn.log_softmax(logits, axis=-1)


def _reference_bf16(xs_stacked, w1, b1, w2, b2):
    # reference with the same bf16-in / f32-accumulate arithmetic as the kernel
    K = xs_stacked.shape[0]
    hs = []
    for k in range(K):
        h = jnp.dot(xs_stacked[k].astype(jnp.bfloat16),
                    w1[k].astype(jnp.bfloat16),
                    preferred_element_type=jnp.float32) + b1[k]
        hs.append(jnp.maximum(h, 0.0).astype(jnp.bfloat16))
    x = jnp.concatenate(hs, axis=-1)
    w_full = w2.reshape(-1, w2.shape[-1]).astype(jnp.bfloat16)
    logits = jnp.dot(x, w_full, preferred_element_type=jnp.float32) + b2
    return jax.nn.log_softmax(logits, axis=-1)


if __name__ == "__main__":
    # small shapes consistent with the module
    num_layers = 3                  # -> K = num_layers + 1 = 4 branch Linears
    K = num_layers + 1
    N = 1000                        # number of nodes (deliberately not a tile multiple)
    in_channels = 64
    hidden_channels = 32
    out_channels = 8

    key = jax.random.PRNGKey(0)
    k_xs, k_w1, k_b1, k_w2, k_b2 = jax.random.split(key, 5)

    # inputs: list of K feature matrices, stacked to [K, N, Fin]
    xs_stacked = jax.random.normal(k_xs, (K, N, in_channels), dtype=jnp.float32)

    # deterministic param init (PyTorch Linear-style uniform bounds)
    bound1 = 1.0 / jnp.sqrt(in_channels)
    w1 = jax.random.uniform(k_w1, (K, in_channels, hidden_channels),
                            minval=-bound1, maxval=bound1, dtype=jnp.float32)
    b1 = jax.random.uniform(k_b1, (K, hidden_channels),
                            minval=-bound1, maxval=bound1, dtype=jnp.float32)

    bound2 = 1.0 / jnp.sqrt(K * hidden_channels)
    # final Linear weight [out, K*H] stored pre-transposed & split per branch: [K, H, C]
    w2 = jax.random.uniform(k_w2, (K, hidden_channels, out_channels),
                            minval=-bound2, maxval=bound2, dtype=jnp.float32)
    b2 = jax.random.uniform(k_b2, (out_channels,),
                            minval=-bound2, maxval=bound2, dtype=jnp.float32)

    out = sign_mlp_forward(xs_stacked, w1, b1, w2, b2, tile_m=512)
    out = jax.block_until_ready(out)
    assert out.shape == (N, out_channels)

    # tight check vs a reference using the same bf16/f32 arithmetic
    ref_bf16 = _reference_bf16(xs_stacked, w1, b1, w2, b2)
    assert jnp.allclose(out, ref_bf16, atol=2e-3, rtol=2e-3), "mismatch vs bf16 reference"

    # looser check vs the pure-f32 module semantics (bf16 feed is the only approximation)
    ref_f32 = _reference_f32(xs_stacked, w1, b1, w2, b2)
    assert jnp.allclose(out, ref_f32, atol=5e-2, rtol=0), "mismatch vs f32 reference"

    print("KERNEL_OK")
</pallas_src>

<mosaic_0001>
module attributes {stable_mosaic.version = 11 : i64} {
  func.func @_sign_mlp_kernel(%arg0: i32, %arg1: memref<512x256xbf16, #tpu.memory_space<vmem>>, %arg2: memref<256x128xbf16, #tpu.memory_space<vmem>>, %arg3: memref<1x128xf32, #tpu.memory_space<vmem>>, %arg4: memref<128x8xbf16, #tpu.memory_space<vmem>>, %arg5: memref<1x8xf32, #tpu.memory_space<vmem>>, %arg6: memref<512x8xf32, #tpu.memory_space<vmem>>) attributes {dimension_semantics = [#tpu.dimension_semantics<parallel>], iteration_bounds = array<i64: 2>, scalar_prefetch = 0 : i64, scratch_operands = 0 : i64, tpu.core_type = #tpu.core_type<tc>, window_params = [{transform_indices = @transform_0, window_bounds = array<i64: 512, 256>}, {pipeline_mode = #tpu.pipeline_mode<synchronous>, transform_indices = @transform_1, window_bounds = array<i64: 256, 128>}, {pipeline_mode = #tpu.pipeline_mode<synchronous>, transform_indices = @transform_2, window_bounds = array<i64: 1, 128>}, {pipeline_mode = #tpu.pipeline_mode<synchronous>, transform_indices = @transform_3, window_bounds = array<i64: 128, 8>}, {pipeline_mode = #tpu.pipeline_mode<synchronous>, transform_indices = @transform_4, window_bounds = array<i64: 1, 8>}, {transform_indices = @transform_5, window_bounds = array<i64: 512, 8>}]} {
    %c0 = arith.constant 0 : index
    %c0_0 = arith.constant 0 : index
    %0 = vector.load %arg1[%c0, %c0_0] : memref<512x256xbf16, #tpu.memory_space<vmem>>, vector<512x256xbf16>
    %c0_1 = arith.constant 0 : index
    %c0_2 = arith.constant 0 : index
    %1 = vector.load %arg2[%c0_1, %c0_2] : memref<256x128xbf16, #tpu.memory_space<vmem>>, vector<256x128xbf16>
    %cst = arith.constant dense<0.000000e+00> : vector<512x128xf32>
    %2 = tpu.matmul %0, %1, %cst {dimension_numbers = #tpu.dot_dimension_numbers<[1], [0], [0], [1], [0, 0, 1, 1], [], []>} : vector<512x256xbf16>, vector<256x128xbf16>, vector<512x128xf32> -> vector<512x128xf32>
    %c0_3 = arith.constant 0 : index
    %c0_4 = arith.constant 0 : index
    %3 = vector.load %arg3[%c0_3, %c0_4] : memref<1x128xf32, #tpu.memory_space<vmem>>, vector<1x128xf32>
    %4 = vector.broadcast %3 : vector<1x128xf32> to vector<512x128xf32>
    %5 = arith.addf %2, %4 : vector<512x128xf32>
    %cst_5 = arith.constant 0.000000e+00 : f32
    %6 = vector.broadcast %cst_5 : f32 to vector<512x128xf32>
    %7 = arith.maximumf %5, %6 : vector<512x128xf32>
    %8 = arith.truncf %7 : vector<512x128xf32> to vector<512x128xbf16>
    %c0_6 = arith.constant 0 : index
    %c0_7 = arith.constant 0 : index
    %9 = vector.load %arg4[%c0_6, %c0_7] : memref<128x8xbf16, #tpu.memory_space<vmem>>, vector<128x8xbf16>
    %cst_8 = arith.constant dense<0.000000e+00> : vector<512x8xf32>
    %10 = tpu.matmul %8, %9, %cst_8 {dimension_numbers = #tpu.dot_dimension_numbers<[1], [0], [0], [1], [0, 0, 1, 1], [], []>} : vector<512x128xbf16>, vector<128x8xbf16>, vector<512x8xf32> -> vector<512x8xf32>
    %c0_9 = arith.constant 0 : index
    %c0_10 = arith.constant 0 : index
    %11 = vector.load %arg5[%c0_9, %c0_10] : memref<1x8xf32, #tpu.memory_space<vmem>>, vector<1x8xf32>
    %12 = vector.broadcast %11 : vector<1x8xf32> to vector<512x8xf32>
    %13 = arith.addf %10, %12 : vector<512x8xf32>
    %cst_11 = arith.constant dense<0xFF800000> : vector<512xf32>
    %14 = vector.multi_reduction <maximumf>, %13, %cst_11 [1] : vector<512x8xf32> to vector<512xf32>
    %15 = vector.shape_cast %14 : vector<512xf32> to vector<512x1xf32>
    %16 = vector.broadcast %15 : vector<512x1xf32> to vector<512x8xf32>
    %17 = arith.subf %13, %16 : vector<512x8xf32>
    %18 = math.exp %17 : vector<512x8xf32>
    %cst_12 = arith.constant dense<0.000000e+00> : vector<512xf32>
    %19 = vector.multi_reduction <add>, %18, %cst_12 [1] : vector<512x8xf32> to vector<512xf32>
    %20 = vector.shape_cast %19 : vector<512xf32> to vector<512x1xf32>
    %21 = math.log %20 : vector<512x1xf32>
    %22 = vector.broadcast %21 : vector<512x1xf32> to vector<512x8xf32>
    %23 = arith.subf %17, %22 : vector<512x8xf32>
    %c0_13 = arith.constant 0 : index
    %c0_14 = arith.constant 0 : index
    %24 = vector.load %arg6[%c0_13, %c0_14] : memref<512x8xf32, #tpu.memory_space<vmem>>, vector<512x8xf32>
    tpu.vector_store %arg6[%c0_13, %c0_14], %23 {strides = array<i32>} : memref<512x8xf32, #tpu.memory_space<vmem>>, vector<512x8xf32>,
    return
  }
  func.func @transform_0(%arg0: i32) -> (i32, i32) {
    %c0_i32 = arith.constant 0 : i32
    %c0_i32_0 = arith.constant 0 : i32
    return %arg0, %c0_i32 : i32, i32
  }
  func.func @transform_1(%arg0: i32) -> (i32, i32) {
    %c0_i32 = arith.constant 0 : i32
    %c0_i32_0 = arith.constant 0 : i32
    %c0_i32_1 = arith.constant 0 : i32
    return %c0_i32, %c0_i32_0 : i32, i32
  }
  func.func @transform_2(%arg0: i32) -> (i32, i32) {
    %c0_i32 = arith.constant 0 : i32
    %c0_i32_0 = arith.constant 0 : i32
    %c0_i32_1 = arith.constant 0 : i32
    return %c0_i32, %c0_i32_0 : i32, i32
  }
  func.func @transform_3(%arg0: i32) -> (i32, i32) {
    %c0_i32 = arith.constant 0 : i32
    %c0_i32_0 = arith.constant 0 : i32
    %c0_i32_1 = arith.constant 0 : i32
    return %c0_i32, %c0_i32_0 : i32, i32
  }
  func.func @transform_4(%arg0: i32) -> (i32, i32) {
    %c0_i32 = arith.constant 0 : i32
    %c0_i32_0 = arith.constant 0 : i32
    %c0_i32_1 = arith.constant 0 : i32
    return %c0_i32, %c0_i32_0 : i32, i32
  }
  func.func @transform_5(%arg0: i32) -> (i32, i32) {
    %c0_i32 = arith.constant 0 : i32
    %c0_i32_0 = arith.constant 0 : i32
    return %arg0, %c0_i32 : i32, i32
  }
}

</mosaic_0001>

<llo_original>
// kernel: tpu_custom_call.1
$region0: #{tpu_custom_call.1}
  #allocation0 [shape = 'u32[]', space=smem, size = 0x4, offset = 0x4, fixed_abs, tag = 'smem constant byte address 0x4 - core index']
  #allocation1 [shape = 'u32[72,128]{1,0:T(1,128)}', space=vmem, size = 0x9000, scoped, tag = 'internal scratch']
  %s0 = inlined_call_operand.hbm [shape: bf16[1024,256], index: 0, kind: input, shape index: {}]
  %s1 = inlined_call_operand.hbm [shape: bf16[256,128], index: 1, kind: input, shape index: {}]
  %s2 = inlined_call_operand.vmem [shape: f32[1,128], index: 2, kind: input, shape index: {}]
  %s3 = inlined_call_operand.vmem [shape: bf16[128,8], index: 3, kind: input, shape index: {}]
  %s4 = inlined_call_operand.vmem [shape: f32[1,8], index: 4, kind: input, shape index: {}]
  %s5 = inlined_call_operand.vmem [shape: f32[1024,8], index: 5, kind: output, shape index: {}]
  %s6 = sld [smem:[#allocation0]]
  $region61: #{tpu_custom_call.1} parent=0
    _
  %s8 = ssub.s32 1, %s6
  %s9 = scalar_select 0, %s8, %s6
  $region1: #{tpu_custom_call.1} parent=0
    #allocation2 [shape = 'u8[524288]{0}', space=vmem, size = 0x80000, scoped, tag = 'input window, operand 0']
    #allocation3 [shape = 's32[2]{0}', space=sflag, size = 0x8, scoped, tag = 'scoped memory for tpu_custom_call.1']
    #allocation4 [shape = 'u8[65536]{0}', space=vmem, size = 0x10000, scoped, tag = 'input window, operand 1, single buffered']
    #allocation5 [shape = 's32[1]{0}', space=sflag, size = 0x4, scoped, tag = 'scoped memory for tpu_custom_call.1']
    %10 = vsyncpa [#allocation3], 0
    %s11 = scalar_lea.sflag [#allocation3], 1
    %12 = vsyncpa %s11, 0
    %13 = vsyncpa [#allocation5], 0
    loop: start=0, step=1, limit=4
    $region2: #{tpu_custom_call.1} parent=1 // loop_pre_header
      _
    $region3: #{tpu_custom_call.1} parent=1 // loop_header
      %s15 = sphi 0, %s19
      %p16 = scmp.ge.s32.totalorder %s15, 4
      %s25 = sphi 0, %s27
      %s28 = sphi 0, %s25
      %s29 = sphi 0, %s28
      %s45 = sphi 0, %s29
      %s49 = sphi 0, %s49
      %s51 = sphi 0, %s49
      %s52 = sphi 0, %s51
      %s66 = sphi 0, %s52
      %s70 = sphi 0, %s70
      %s72 = sphi 0, %s70
      %s73 = sphi 0, %s72
      %s87 = sphi 0, %s73
      %s91 = sphi 0, %s91
      %s93 = sphi 0, %s91
      %s94 = sphi 0, %s93
      %s108 = sphi 0, %s94
      %s112 = sphi 0, %s112
      %s114 = sphi 0, %s112
      %s115 = sphi 0, %s114
      %s129 = sphi 0, %s115
      %s135 = sphi 0, %s137
      %s138 = sphi 0, %s135
      %s139 = sphi 0, %s138
      %s155 = sphi 0, %s139
    $region4: #{tpu_custom_call.1} parent=1 // loop_header_branch
      %18 = sbr.rel (%p16) target = $region8
    $region5: #{tpu_custom_call.1} parent=1 // loop_body
      %s20 = ssub.s32 %s15, 1
      %s21 = ssub.s32 %s15, 2
      %s22 = sadd.s32 %s15, 1
      %s23 = ssub.s32 %s15, %s22
      %p24 = scmp.eq.s32.totalorder %s23, 0
      %s26 = sadd.s32 %s25, 1
      %s27 = scalar_select %p24, %s25, %s26
      %p30 = pneg %p24
      %p31 = scmp.eq.s32.totalorder %s15, 1
      %p32 = por %p30, %p31
      %p33 = scmp.ne.s32.totalorder %s25, %s28
      %p34 = scmp.eq.s32.totalorder %s15, 0
      %p35 = por %p33, %p34
      %p36 = scmp.ne.s32.totalorder %s25, %s28
      %p37 = scmp.eq.s32.totalorder %s20, 1
      %p38 = por %p36, %p37
      %p39 = scmp.ne.s32.totalorder %s28, %s29
      %p40 = scmp.eq.s32.totalorder %s20, 0
      %p41 = por %p39, %p40
      %p42 = scmp.ne.s32.totalorder %s28, %s29
      %p43 = scmp.eq.s32.totalorder %s21, 1
      %p44 = por %p42, %p43
      %p46 = scmp.ne.s32.totalorder %s29, %s45
      %p47 = scmp.eq.s32.totalorder %s21, 0
      %p48 = por %p46, %p47
      %s50 = sadd.s32 %s49, 1
      %p53 = scmp.eq.s32.totalorder %s15, 1
      %p54 = scmp.ne.s32.totalorder %s49, %s51
      %p55 = scmp.eq.s32.totalorder %s15, 0
      %p56 = por %p54, %p55
      %p57 = scmp.ne.s32.totalorder %s49, %s51
      %p58 = scmp.eq.s32.totalorder %s20, 1
      %p59 = por %p57, %p58
      %p60 = scmp.ne.s32.totalorder %s51, %s52
      %p61 = scmp.eq.s32.totalorder %s20, 0
      %p62 = por %p60, %p61
      %p63 = scmp.ne.s32.totalorder %s51, %s52
      %p64 = scmp.eq.s32.totalorder %s21, 1
      %p65 = por %p63, %p64
      %p67 = scmp.ne.s32.totalorder %s52, %s66
      %p68 = scmp.eq.s32.totalorder %s21, 0
      %p69 = por %p67, %p68
      %s71 = sadd.s32 %s70, 1
      %p74 = scmp.eq.s32.totalorder %s15, 1
      %p75 = scmp.ne.s32.totalorder %s70, %s72
      %p76 = scmp.eq.s32.totalorder %s15, 0
      %p77 = por %p75, %p76
      %p78 = scmp.ne.s32.totalorder %s70, %s72
      %p79 = scmp.eq.s32.totalorder %s20, 1
      %p80 = por %p78, %p79
      %p81 = scmp.ne.s32.totalorder %s72, %s73
      %p82 = scmp.eq.s32.totalorder %s20, 0
      %p83 = por %p81, %p82
      %p84 = scmp.ne.s32.totalorder %s72, %s73
      %p85 = scmp.eq.s32.totalorder %s21, 1
      %p86 = por %p84, %p85
      %p88 = scmp.ne.s32.totalorder %s73, %s87
      %p89 = scmp.eq.s32.totalorder %s21, 0
      %p90 = por %p88, %p89
      %s92 = sadd.s32 %s91, 1
      %p95 = scmp.eq.s32.totalorder %s15, 1
      %p96 = scmp.ne.s32.totalorder %s91, %s93
      %p97 = scmp.eq.s32.totalorder %s15, 0
      %p98 = por %p96, %p97
      %p99 = scmp.ne.s32.totalorder %s91, %s93
      %p100 = scmp.eq.s32.totalorder %s20, 1
      %p101 = por %p99, %p100
      %p102 = scmp.ne.s32.totalorder %s93, %s94
      %p103 = scmp.eq.s32.totalorder %s20, 0
      %p104 = por %p102, %p103
      %p105 = scmp.ne.s32.totalorder %s93, %s94
      %p106 = scmp.eq.s32.totalorder %s21, 1
      %p107 = por %p105, %p106
      %p109 = scmp.ne.s32.totalorder %s94, %s108
      %p110 = scmp.eq.s32.totalorder %s21, 0
      %p111 = por %p109, %p110
      %s113 = sadd.s32 %s112, 1
      %p116 = scmp.eq.s32.totalorder %s15, 1
      %p117 = scmp.ne.s32.totalorder %s112, %s114
      %p118 = scmp.eq.s32.totalorder %s15, 0
      %p119 = por %p117, %p118
      %p120 = scmp.ne.s32.totalorder %s112, %s114
      %p121 = scmp.eq.s32.totalorder %s20, 1
      %p122 = por %p120, %p121
      %p123 = scmp.ne.s32.totalorder %s114, %s115
      %p124 = scmp.eq.s32.totalorder %s20, 0
      %p125 = por %p123, %p124
      %p126 = scmp.ne.s32.totalorder %s114, %s115
      %p127 = scmp.eq.s32.totalorder %s21, 1
      %p128 = por %p126, %p127
      %p130 = scmp.ne.s32.totalorder %s115, %s129
      %p131 = scmp.eq.s32.totalorder %s21, 0
      %p132 = por %p130, %p131
      %s133 = ssub.s32 %s15, %s22
      %p134 = scmp.eq.s32.totalorder %s133, 0
      %s136 = sadd.s32 %s135, 1
      %s137 = scalar_select %p134, %s135, %s136
      %p140 = pneg %p134
      %p141 = scmp.eq.s32.totalorder %s15, 1
      %p142 = por %p140, %p141
      %p143 = scmp.ne.s32.totalorder %s135, %s138
      %p144 = scmp.eq.s32.totalorder %s15, 0
      %p145 = por %p143, %p144
      %p146 = scmp.ne.s32.totalorder %s135, %s138
      %p147 = scmp.eq.s32.totalorder %s20, 1
      %p148 = por %p146, %p147
      %p149 = scmp.ne.s32.totalorder %s138, %s139
      %p150 = scmp.eq.s32.totalorder %s20, 0
      %p151 = por %p149, %p150
      %p152 = scmp.ne.s32.totalorder %s138, %s139
      %p153 = scmp.eq.s32.totalorder %s21, 1
      %p154 = por %p152, %p153
      %p156 = scmp.ne.s32.totalorder %s139, %s155
      %p157 = scmp.eq.s32.totalorder %s21, 0
      %p158 = por %p156, %p157
      %p159 = scmp.le.s32.totalorder 1, %s15
      %p160 = scmp.lt.s32.totalorder %s15, 3
      %p161 = pnand %p159, %p160
      %p162 = pneg %p161
      // Predicated region
      $region9: #{tpu_custom_call.1} parent=5 // pred_check
        _
      $region10: #{tpu_custom_call.1} parent=5 // pred_check_branch
        %164 = sbr.rel (%p161) target = $region12
      $region11: #{tpu_custom_call.1} parent=5 // pred_region
        %s165 = ssub.s32 %s15, 1
        // Predicated region
        $region13: #{tpu_custom_call.1} parent=11 // pred_check
          %p166 = pneg %p62
        $region14: #{tpu_custom_call.1} parent=11 // pred_check_branch
          %168 = sbr.rel (%p166) target = $region16
        $region15: #{tpu_custom_call.1} parent=11 // pred_region
          %170 = vsyncadd [#allocation5], 0
          %s171 = sshll.u32 %s1, 4
          %s172 = int_to_ptr.hbm [resolvable:$true] %s171
          %s173 = sshll.u32 [#allocation4], 4
          %s174 = int_to_ptr.vmem [resolvable:$true] %s173
          %179 = dma.hbm_to_vmem [thread:$0]  %s172, 2048, %s174, [#allocation5], 64, 64, 4
        $region16: #{tpu_custom_call.1} parent=11 // pred_fallthru
          _
        // Predicated region
        $region17: #{tpu_custom_call.1} parent=11 // pred_check
          %p180 = pneg %p83
        $region18: #{tpu_custom_call.1} parent=11 // pred_check_branch
          %182 = sbr.rel (%p180) target = $region20
        $region19: #{tpu_custom_call.1} parent=11 // pred_region
          _
        $region20: #{tpu_custom_call.1} parent=11 // pred_fallthru
          _
        // Predicated region
        $region21: #{tpu_custom_call.1} parent=11 // pred_check
          %p183 = pneg %p104
        $region22: #{tpu_custom_call.1} parent=11 // pred_check_branch
          %185 = sbr.rel (%p183) target = $region24
        $region23: #{tpu_custom_call.1} parent=11 // pred_region
          _
        $region24: #{tpu_custom_call.1} parent=11 // pred_fallthru
          _
        // Predicated region
        $region25: #{tpu_custom_call.1} parent=11 // pred_check
          %p186 = pneg %p125
        $region26: #{tpu_custom_call.1} parent=11 // pred_check_branch
          %188 = sbr.rel (%p186) target = $region28
        $region27: #{tpu_custom_call.1} parent=11 // pred_region
          _
        $region28: #{tpu_custom_call.1} parent=11 // pred_fallthru
          _
      $region12: #{tpu_custom_call.1} parent=5 // pred_fallthru
        _
      %p189 = scmp.lt.s32.totalorder %s15, 2
      // Predicated region
      $region29: #{tpu_custom_call.1} parent=5 // pred_check
        %p190 = pneg %p189
      $region30: #{tpu_custom_call.1} parent=5 // pred_check_branch
        %192 = sbr.rel (%p190) target = $region32
      $region31: #{tpu_custom_call.1} parent=5 // pred_region
        // Predicated region
        $region33: #{tpu_custom_call.1} parent=31 // pred_check
          %p193 = pneg %p35
        $region34: #{tpu_custom_call.1} parent=31 // pred_check_branch
          %195 = sbr.rel (%p193) target = $region36
        $region35: #{tpu_custom_call.1} parent=31 // pred_region
          %s196 = sand.u32 %s25, 1
          %s197 = scalar_lea.sflag [#allocation3], %s196
          %s198 = sand.u32 %s25, 1
          %s199 = smul.addr %s198, 512
          %s200 = scalar_lea.vmem [#allocation2], %s199
          %s201 = smul.u32 64, %s15
          %203 = vsyncadd %s197, 0
          %s204 = smul.addr %s201, 2
          %s205 = smul.addr %s204, 4
          %s206 = scalar_lea.hbm %s0, %s205
          %s207 = sshll.u32 %s206, 4
          %s208 = int_to_ptr.hbm [resolvable:$true] %s207
          %s209 = sshll.u32 %s200, 4
          %s210 = int_to_ptr.vmem [resolvable:$true] %s209
          %215 = dma.hbm_to_vmem [thread:$0]  %s208, 8192, %s210, %s197, 128, 128, 8
        $region36: #{tpu_custom_call.1} parent=31 // pred_fallthru
          _
      $region32: #{tpu_custom_call.1} parent=5 // pred_fallthru
        _
      %p216 = scmp.le.s32.totalorder 1, %s15
      %p217 = scmp.lt.s32.totalorder %s15, 3
      %p218 = pnand %p216, %p217
      %p219 = pneg %p218
      // Predicated region
      $region37: #{tpu_custom_call.1} parent=5 // pred_check
        _
      $region38: #{tpu_custom_call.1} parent=5 // pred_check_branch
        %221 = sbr.rel (%p218) target = $region40
      $region39: #{tpu_custom_call.1} parent=5 // pred_region
        %s222 = ssub.s32 %s15, 1
        %s223 = sand.u32 %s28, 1
        %s224 = scalar_lea.sflag [#allocation3], %s223
        %s225 = sand.u32 %s28, 1
        %s226 = smul.addr %s225, 512
        %s227 = scalar_lea.vmem [#allocation2], %s226
        // Predicated region
        $region41: #{tpu_custom_call.1} parent=39 // pred_check
          %p228 = pneg %p41
        $region42: #{tpu_custom_call.1} parent=39 // pred_check_branch
          %230 = sbr.rel (%p228) target = $region44
        $region43: #{tpu_custom_call.1} parent=39 // pred_region
          %232 = dma.done %s224, 8192
        $region44: #{tpu_custom_call.1} parent=39 // pred_fallthru
          _
        // Predicated region
        $region45: #{tpu_custom_call.1} parent=39 // pred_check
          %p233 = pneg %p62
        $region46: #{tpu_custom_call.1} parent=39 // pred_check_branch
          %235 = sbr.rel (%p233) target = $region48
        $region47: #{tpu_custom_call.1} parent=39 // pred_region
          %237 = dma.done [#allocation5], 2048
        $region48: #{tpu_custom_call.1} parent=39 // pred_fallthru
          _
        %s238 = sand.u32 %s28, 1
        %s239 = scalar_lea.sflag [#allocation3], %s238
        %s240 = sand.u32 %s28, 1
        %s241 = smul.addr %s240, 512
        %s242 = scalar_lea.vmem [#allocation2], %s241
        %p243 = pneg %p41
        %p244 = pneg %p38
        %p245 = pneg %p62
        %p246 = pneg %p59
        %p247 = pneg %p83
        %p248 = pneg %p80
        %p249 = pneg %p104
        %p250 = pneg %p101
        %p251 = pneg %p125
        %p252 = pneg %p122
        %p253 = pneg %p151
        %p254 = pneg %p148
        %s255 = smul.u32 64, %s20
        %p256 = scmp.lt.s32.totalorder %s255, 127
        %s257 = scalar_select %p256, %s255, 127
        %s258 = smul.addr %s257, 8
        %s259 = scalar_lea.vmem %s5, %s258
        %s260 = smul.u32 64, %s20
        %s261 = smul.u32 64, %s20
        %p262 = scmp.lt.s32.totalorder %s261, 127
        %s263 = scalar_select %p262, %s261, 127
        %s264 = smul.addr %s263, 8
        %s265 = scalar_lea.vmem %s5, %s264
        %s266 = smul.u32 64, %s20
        %v267 = vld [vmem:[%s227] sm:$0xff]
        %v268 = vld [vmem:[%s227 + $0x8] sm:$0xff]
        %v269 = vld [vmem:[%s227 + $0x10] sm:$0xff]
        %v270 = vld [vmem:[%s227 + $0x18] sm:$0xff]
        %v271 = vld [vmem:[%s227 + $0x20] sm:$0xff]
        %v272 = vld [vmem:[%s227 + $0x28] sm:$0xff]
        %v273 = vld [vmem:[%s227 + $0x30] sm:$0xff]
        %v274 = vld [vmem:[%s227 + $0x38] sm:$0xff]
        %v275 = vld [vmem:[%s227 + $0x40] sm:$0xff]
        %v276 = vld [vmem:[%s227 + $0x48] sm:$0xff]
        %v277 = vld [vmem:[%s227 + $0x50] sm:$0xff]
        %v278 = vld [vmem:[%s227 + $0x58] sm:$0xff]
        %v279 = vld [vmem:[%s227 + $0x60] sm:$0xff]
        %v280 = vld [vmem:[%s227 + $0x68] sm:$0xff]
        %v281 = vld [vmem:[%s227 + $0x70] sm:$0xff]
        %v282 = vld [vmem:[%s227 + $0x78] sm:$0xff]
        %v283 = vld [vmem:[%s227 + $0x80] sm:$0xff]
        %v284 = vld [vmem:[%s227 + $0x88] sm:$0xff]
        %v285 = vld [vmem:[%s227 + $0x90] sm:$0xff]
        %v286 = vld [vmem:[%s227 + $0x98] sm:$0xff]
        %v287 = vld [vmem:[%s227 + $0xa0] sm:$0xff]
        %v288 = vld [vmem:[%s227 + $0xa8] sm:$0xff]
        %v289 = vld [vmem:[%s227 + $0xb0] sm:$0xff]
        %v290 = vld [vmem:[%s227 + $0xb8] sm:$0xff]
        %v291 = vld [vmem:[%s227 + $0xc0] sm:$0xff]
        %v292 = vld [vmem:[%s227 + $0xc8] sm:$0xff]
        %v293 = vld [vmem:[%s227 + $0xd0] sm:$0xff]
        %v294 = vld [vmem:[%s227 + $0xd8] sm:$0xff]
        %v295 = vld [vmem:[%s227 + $0xe0] sm:$0xff]
        %v296 = vld [vmem:[%s227 + $0xe8] sm:$0xff]
        %v297 = vld [vmem:[%s227 + $0xf0] sm:$0xff]
        %v298 = vld [vmem:[%s227 + $0xf8] sm:$0xff]
        %v299 = vld [vmem:[%s227 + $0x100] sm:$0xff]
        %v300 = vld [vmem:[%s227 + $0x108] sm:$0xff]
        %v301 = vld [vmem:[%s227 + $0x110] sm:$0xff]
        %v302 = vld [vmem:[%s227 + $0x118] sm:$0xff]
        %v303 = vld [vmem:[%s227 + $0x120] sm:$0xff]
        %v304 = vld [vmem:[%s227 + $0x128] sm:$0xff]
        %v305 = vld [vmem:[%s227 + $0x130] sm:$0xff]
        %v306 = vld [vmem:[%s227 + $0x138] sm:$0xff]
        %v307 = vld [vmem:[%s227 + $0x140] sm:$0xff]
        %v308 = vld [vmem:[%s227 + $0x148] sm:$0xff]
        %v309 = vld [vmem:[%s227 + $0x150] sm:$0xff]
        %v310 = vld [vmem:[%s227 + $0x158] sm:$0xff]
        %v311 = vld [vmem:[%s227 + $0x160] sm:$0xff]
        %v312 = vld [vmem:[%s227 + $0x168] sm:$0xff]
        %v313 = vld [vmem:[%s227 + $0x170] sm:$0xff]
        %v314 = vld [vmem:[%s227 + $0x178] sm:$0xff]
        %v315 = vld [vmem:[%s227 + $0x180] sm:$0xff]
        %v316 = vld [vmem:[%s227 + $0x188] sm:$0xff]
        %v317 = vld [vmem:[%s227 + $0x190] sm:$0xff]
        %v318 = vld [vmem:[%s227 + $0x198] sm:$0xff]
        %v319 = vld [vmem:[%s227 + $0x1a0] sm:$0xff]
        %v320 = vld [vmem:[%s227 + $0x1a8] sm:$0xff]
        %v321 = vld [vmem:[%s227 + $0x1b0] sm:$0xff]
        %v322 = vld [vmem:[%s227 + $0x1b8] sm:$0xff]
        %v323 = vld [vmem:[%s227 + $0x1c0] sm:$0xff]
        %v324 = vld [vmem:[%s227 + $0x1c8] sm:$0xff]
        %v325 = vld [vmem:[%s227 + $0x1d0] sm:$0xff]
        %v326 = vld [vmem:[%s227 + $0x1d8] sm:$0xff]
        %v327 = vld [vmem:[%s227 + $0x1e0] sm:$0xff]
        %v328 = vld [vmem:[%s227 + $0x1e8] sm:$0xff]
        %v329 = vld [vmem:[%s227 + $0x1f0] sm:$0xff]
        %v330 = vld [vmem:[%s227 + $0x1f8] sm:$0xff]
        %v331 = vld [vmem:[#allocation4] sm:$0xf]
        %v332 = vld [vmem:[#allocation4 + $0x4] sm:$0xf]
        %v333 = vld [vmem:[#allocation4 + $0x8] sm:$0xf]
        %v334 = vld [vmem:[#allocation4 + $0xc] sm:$0xf]
        %v335 = vld [vmem:[#allocation4 + $0x10] sm:$0xf]
        %v336 = vld [vmem:[#allocation4 + $0x14] sm:$0xf]
        %v337 = vld [vmem:[#allocation4 + $0x18] sm:$0xf]
        %v338 = vld [vmem:[#allocation4 + $0x1c] sm:$0xf]
        %v339 = vld [vmem:[#allocation4 + $0x20] sm:$0xf]
        %v340 = vld [vmem:[#allocation4 + $0x24] sm:$0xf]
        %v341 = vld [vmem:[#allocation4 + $0x28] sm:$0xf]
        %v342 = vld [vmem:[#allocation4 + $0x2c] sm:$0xf]
        %v343 = vld [vmem:[#allocation4 + $0x30] sm:$0xf]
        %v344 = vld [vmem:[#allocation4 + $0x34] sm:$0xf]
        %v345 = vld [vmem:[#allocation4 + $0x38] sm:$0xf]
        %v346 = vld [vmem:[#allocation4 + $0x3c] sm:$0xf]
        %v347 = vld [vmem:[#allocation4 + $0x40] sm:$0xf]
        %v348 = vld [vmem:[#allocation4 + $0x44] sm:$0xf]
        %v349 = vld [vmem:[#allocation4 + $0x48] sm:$0xf]
        %v350 = vld [vmem:[#allocation4 + $0x4c] sm:$0xf]
        %v351 = vld [vmem:[#allocation4 + $0x50] sm:$0xf]
        %v352 = vld [vmem:[#allocation4 + $0x54] sm:$0xf]
        %v353 = vld [vmem:[#allocation4 + $0x58] sm:$0xf]
        %v354 = vld [vmem:[#allocation4 + $0x5c] sm:$0xf]
        %v355 = vld [vmem:[#allocation4 + $0x60] sm:$0xf]
        %v356 = vld [vmem:[#allocation4 + $0x64] sm:$0xf]
        %v357 = vld [vmem:[#allocation4 + $0x68] sm:$0xf]
        %v358 = vld [vmem:[#allocation4 + $0x6c] sm:$0xf]
        %v359 = vld [vmem:[#allocation4 + $0x70] sm:$0xf]
        %v360 = vld [vmem:[#allocation4 + $0x74] sm:$0xf]
        %v361 = vld [vmem:[#allocation4 + $0x78] sm:$0xf]
        %v362 = vld [vmem:[#allocation4 + $0x7c] sm:$0xf]
        %v363 = vld [vmem:[%s2] sm:$0x1]
        %v365 = vperm.slane %v363, 0
        %v431 = vunpack.c.l.b16 %v267
        %v432 = vunpack.c.h.b16 %v267
        %v433 = vunpack.c.l.b16 %v268
        %v434 = vunpack.c.h.b16 %v268
        %v435 = vunpack.c.l.b16 %v269
        %v436 = vunpack.c.h.b16 %v269
        %v437 = vunpack.c.l.b16 %v270
        %v438 = vunpack.c.h.b16 %v270
        %v439 = vunpack.c.l.b16 %v271
        %v440 = vunpack.c.h.b16 %v271
        %v441 = vunpack.c.l.b16 %v272
        %v442 = vunpack.c.h.b16 %v272
        %v443 = vunpack.c.l.b16 %v273
        %v444 = vunpack.c.h.b16 %v273
        %v445 = vunpack.c.l.b16 %v274
        %v446 = vunpack.c.h.b16 %v274
        %v447 = vunpack.c.l.b16 %v275
        %v448 = vunpack.c.h.b16 %v275
        %v449 = vunpack.c.l.b16 %v276
        %v450 = vunpack.c.h.b16 %v276
        %v451 = vunpack.c.l.b16 %v277
        %v452 = vunpack.c.h.b16 %v277
        %v453 = vunpack.c.l.b16 %v278
        %v454 = vunpack.c.h.b16 %v278
        %v455 = vunpack.c.l.b16 %v279
        %v456 = vunpack.c.h.b16 %v279
        %v457 = vunpack.c.l.b16 %v280
        %v458 = vunpack.c.h.b16 %v280
        %v459 = vunpack.c.l.b16 %v281
        %v460 = vunpack.c.h.b16 %v281
        %v461 = vunpack.c.l.b16 %v282
        %v462 = vunpack.c.h.b16 %v282
        %v463 = vunpack.c.l.b16 %v283
        %v464 = vunpack.c.h.b16 %v283
        %v465 = vunpack.c.l.b16 %v284
        %v466 = vunpack.c.h.b16 %v284
        %v467 = vunpack.c.l.b16 %v285
        %v468 = vunpack.c.h.b16 %v285
        %v469 = vunpack.c.l.b16 %v286
        %v470 = vunpack.c.h.b16 %v286
        %v471 = vunpack.c.l.b16 %v287
        %v472 = vunpack.c.h.b16 %v287
        %v473 = vunpack.c.l.b16 %v288
        %v474 = vunpack.c.h.b16 %v288
        %v475 = vunpack.c.l.b16 %v289
        %v476 = vunpack.c.h.b16 %v289
        %v477 = vunpack.c.l.b16 %v290
        %v478 = vunpack.c.h.b16 %v290
        %v479 = vunpack.c.l.b16 %v291
        %v480 = vunpack.c.h.b16 %v291
        %v481 = vunpack.c.l.b16 %v292
        %v482 = vunpack.c.h.b16 %v292
        %v483 = vunpack.c.l.b16 %v293
        %v484 = vunpack.c.h.b16 %v293
        %v485 = vunpack.c.l.b16 %v294
        %v486 = vunpack.c.h.b16 %v294
        %v487 = vunpack.c.l.b16 %v295
        %v488 = vunpack.c.h.b16 %v295
        %v489 = vunpack.c.l.b16 %v296
        %v490 = vunpack.c.h.b16 %v296
        %v491 = vunpack.c.l.b16 %v297
        %v492 = vunpack.c.h.b16 %v297
        %v493 = vunpack.c.l.b16 %v298
        %v494 = vunpack.c.h.b16 %v298
        %v495 = vunpack.c.l.b16 %v299
        %v496 = vunpack.c.h.b16 %v299
        %v497 = vunpack.c.l.b16 %v300
        %v498 = vunpack.c.h.b16 %v300
        %v499 = vunpack.c.l.b16 %v301
        %v500 = vunpack.c.h.b16 %v301
        %v501 = vunpack.c.l.b16 %v302
        %v502 = vunpack.c.h.b16 %v302
        %v503 = vunpack.c.l.b16 %v303
        %v504 = vunpack.c.h.b16 %v303
        %v505 = vunpack.c.l.b16 %v304
        %v506 = vunpack.c.h.b16 %v304
        %v507 = vunpack.c.l.b16 %v305
        %v508 = vunpack.c.h.b16 %v305
        %v509 = vunpack.c.l.b16 %v306
        %v510 = vunpack.c.h.b16 %v306
        %v511 = vunpack.c.l.b16 %v307
        %v512 = vunpack.c.h.b16 %v307
        %v513 = vunpack.c.l.b16 %v308
        %v514 = vunpack.c.h.b16 %v308
        %v515 = vunpack.c.l.b16 %v309
        %v516 = vunpack.c.h.b16 %v309
        %v517 = vunpack.c.l.b16 %v310
        %v518 = vunpack.c.h.b16 %v310
        %v519 = vunpack.c.l.b16 %v311
        %v520 = vunpack.c.h.b16 %v311
        %v521 = vunpack.c.l.b16 %v312
        %v522 = vunpack.c.h.b16 %v312
        %v523 = vunpack.c.l.b16 %v313
        %v524 = vunpack.c.h.b16 %v313
        %v525 = vunpack.c.l.b16 %v314
        %v526 = vunpack.c.h.b16 %v314
        %v527 = vunpack.c.l.b16 %v315
        %v528 = vunpack.c.h.b16 %v315
        %v529 = vunpack.c.l.b16 %v316
        %v530 = vunpack.c.h.b16 %v316
        %v531 = vunpack.c.l.b16 %v317
        %v532 = vunpack.c.h.b16 %v317
        %v533 = vunpack.c.l.b16 %v318
        %v534 = vunpack.c.h.b16 %v318
        %v535 = vunpack.c.l.b16 %v319
        %v536 = vunpack.c.h.b16 %v319
        %v537 = vunpack.c.l.b16 %v320
        %v538 = vunpack.c.h.b16 %v320
        %v539 = vunpack.c.l.b16 %v321
        %v540 = vunpack.c.h.b16 %v321
        %v541 = vunpack.c.l.b16 %v322
        %v542 = vunpack.c.h.b16 %v322
        %v543 = vunpack.c.l.b16 %v323
        %v544 = vunpack.c.h.b16 %v323
        %v545 = vunpack.c.l.b16 %v324
        %v546 = vunpack.c.h.b16 %v324
        %v547 = vunpack.c.l.b16 %v325
        %v548 = vunpack.c.h.b16 %v325
        %v549 = vunpack.c.l.b16 %v326
        %v550 = vunpack.c.h.b16 %v326
        %v551 = vunpack.c.l.b16 %v327
        %v552 = vunpack.c.h.b16 %v327
        %v553 = vunpack.c.l.b16 %v328
        %v554 = vunpack.c.h.b16 %v328
        %v555 = vunpack.c.l.b16 %v329
        %v556 = vunpack.c.h.b16 %v329
        %v557 = vunpack.c.l.b16 %v330
        %v558 = vunpack.c.h.b16 %v330
        %v559 = vpack.c.b16 %v433, %v431
        %v560 = vpack.c.b16 %v434, %v432
        %v561 = vpack.c.b16 %v437, %v435
        %v562 = vpack.c.b16 %v438, %v436
        %v563 = vpack.c.b16 %v441, %v439
        %v564 = vpack.c.b16 %v442, %v440
        %v565 = vpack.c.b16 %v445, %v443
        %v566 = vpack.c.b16 %v446, %v444
        %v567 = vpack.c.b16 %v449, %v447
        %v568 = vpack.c.b16 %v450, %v448
        %v569 = vpack.c.b16 %v453, %v451
        %v570 = vpack.c.b16 %v454, %v452
        %v571 = vpack.c.b16 %v457, %v455
        %v572 = vpack.c.b16 %v458, %v456
        %v573 = vpack.c.b16 %v461, %v459
        %v574 = vpack.c.b16 %v462, %v460
        %v575 = vpack.c.b16 %v465, %v463
        %v576 = vpack.c.b16 %v466, %v464
        %v577 = vpack.c.b16 %v469, %v467
        %v578 = vpack.c.b16 %v470, %v468
        %v579 = vpack.c.b16 %v473, %v471
        %v580 = vpack.c.b16 %v474, %v472
        %v581 = vpack.c.b16 %v477, %v475
        %v582 = vpack.c.b16 %v478, %v476
        %v583 = vpack.c.b16 %v481, %v479
        %v584 = vpack.c.b16 %v482, %v480
        %v585 = vpack.c.b16 %v485, %v483
        %v586 = vpack.c.b16 %v486, %v484
        %v587 = vpack.c.b16 %v489, %v487
        %v588 = vpack.c.b16 %v490, %v488
        %v589 = vpack.c.b16 %v493, %v491
        %v590 = vpack.c.b16 %v494, %v492
        %v591 = vpack.c.b16 %v497, %v495
        %v592 = vpack.c.b16 %v498, %v496
        %v593 = vpack.c.b16 %v501, %v499
        %v594 = vpack.c.b16 %v502, %v500
        %v595 = vpack.c.b16 %v505, %v503
        %v596 = vpack.c.b16 %v506, %v504
        %v597 = vpack.c.b16 %v509, %v507
        %v598 = vpack.c.b16 %v510, %v508
        %v599 = vpack.c.b16 %v513, %v511
        %v600 = vpack.c.b16 %v514, %v512
        %v601 = vpack.c.b16 %v517, %v515
        %v602 = vpack.c.b16 %v518, %v516
        %v603 = vpack.c.b16 %v521, %v519
        %v604 = vpack.c.b16 %v522, %v520
        %v605 = vpack.c.b16 %v525, %v523
        %v606 = vpack.c.b16 %v526, %v524
        %v607 = vpack.c.b16 %v529, %v527
        %v608 = vpack.c.b16 %v530, %v528
        %v609 = vpack.c.b16 %v533, %v531
        %v610 = vpack.c.b16 %v534, %v532
        %v611 = vpack.c.b16 %v537, %v535
        %v612 = vpack.c.b16 %v538, %v536
        %v613 = vpack.c.b16 %v541, %v539
        %v614 = vpack.c.b16 %v542, %v540
        %v615 = vpack.c.b16 %v545, %v543
        %v616 = vpack.c.b16 %v546, %v544
        %v617 = vpack.c.b16 %v549, %v547
        %v618 = vpack.c.b16 %v550, %v548
        %v619 = vpack.c.b16 %v553, %v551
        %v620 = vpack.c.b16 %v554, %v552
        %v621 = vpack.c.b16 %v557, %v555
        %v622 = vpack.c.b16 %v558, %v556
        %v719 = vunpack.c.l.b16 %v331
        %v720 = vunpack.c.l.b16 %v332
        %v721 = vunpack.c.l.b16 %v333
        %v722 = vunpack.c.l.b16 %v334
        %v723 = vunpack.c.l.b16 %v335
        %v724 = vunpack.c.l.b16 %v336
        %v725 = vunpack.c.l.b16 %v337
        %v726 = vunpack.c.l.b16 %v338
        %v727 = vunpack.c.l.b16 %v339
        %v728 = vunpack.c.l.b16 %v340
        %v729 = vunpack.c.l.b16 %v341
        %v730 = vunpack.c.l.b16 %v342
        %v731 = vunpack.c.l.b16 %v343
        %v732 = vunpack.c.l.b16 %v344
        %v733 = vunpack.c.l.b16 %v345
        %v734 = vunpack.c.l.b16 %v346
        %v735 = vunpack.c.l.b16 %v347
        %v736 = vunpack.c.l.b16 %v348
        %v737 = vunpack.c.l.b16 %v349
        %v738 = vunpack.c.l.b16 %v350
        %v739 = vunpack.c.l.b16 %v351
        %v740 = vunpack.c.l.b16 %v352
        %v741 = vunpack.c.l.b16 %v353
        %v742 = vunpack.c.l.b16 %v354
        %v743 = vunpack.c.l.b16 %v355
        %v744 = vunpack.c.l.b16 %v356
        %v745 = vunpack.c.l.b16 %v357
        %v746 = vunpack.c.l.b16 %v358
        %v747 = vunpack.c.l.b16 %v359
        %v748 = vunpack.c.l.b16 %v360
        %v749 = vunpack.c.l.b16 %v361
        %v750 = vunpack.c.l.b16 %v362
        %v751 = vpack.c.b16 %v720, %v719
        %v752 = vpack.c.b16 %v722, %v721
        %v753 = vpack.c.b16 %v724, %v723
        %v754 = vpack.c.b16 %v726, %v725
        %v755 = vpack.c.b16 %v728, %v727
        %v756 = vpack.c.b16 %v730, %v729
        %v757 = vpack.c.b16 %v732, %v731
        %v758 = vpack.c.b16 %v734, %v733
        %v759 = vpack.c.b16 %v736, %v735
        %v760 = vpack.c.b16 %v738, %v737
        %v761 = vpack.c.b16 %v740, %v739
        %v762 = vpack.c.b16 %v742, %v741
        %v763 = vpack.c.b16 %v744, %v743
        %v764 = vpack.c.b16 %v746, %v745
        %v765 = vpack.c.b16 %v748, %v747
        %v766 = vpack.c.b16 %v750, %v749
        %783 = vmatpush.bf16.msra.mxu0 %v758
        %784 = vmatpush.bf16.msra.mxu0 %v757
        %785 = vmatpush.bf16.msra.mxu0 %v756
        %786 = vmatpush.bf16.msra.mxu0 %v755
        %787 = vmatpush.bf16.msra.mxu0 %v754
        %788 = vmatpush.bf16.msra.mxu0 %v753
        %789 = vmatpush.bf16.msra.mxu0 %v752
        %790 = vmatpush.bf16.msra.mxu0 %v751
        %791 = vmatmul.bf16.gmra.mxu0 %v559
        %v792 = vpop.f32.mrf.mxu0
        %v793 = vadd.f32 %v365, %v792
        %v794 = vpop.f32.mrf.mxu0
        %v795 = vadd.f32 %v365, %v794
        %796 = vmatmul.bf16.gmra.mxu0 %v561
        %v797 = vpop.f32.mrf.mxu0
        %v798 = vadd.f32 %v365, %v797
        %v799 = vpop.f32.mrf.mxu0
        %v800 = vadd.f32 %v365, %v799
        %801 = vmatmul.bf16.gmra.mxu0 %v563
        %v802 = vpop.f32.mrf.mxu0
        %v803 = vadd.f32 %v365, %v802
        %v804 = vpop.f32.mrf.mxu0
        %v805 = vadd.f32 %v365, %v804
        %806 = vmatmul.bf16.gmra.mxu0 %v565
        %v807 = vpop.f32.mrf.mxu0
        %v808 = vadd.f32 %v365, %v807
        %v809 = vpop.f32.mrf.mxu0
        %v810 = vadd.f32 %v365, %v809
        %811 = vmatmul.bf16.gmra.mxu0 %v567
        %v812 = vpop.f32.mrf.mxu0
        %v813 = vadd.f32 %v365, %v812
        %v814 = vpop.f32.mrf.mxu0
        %v815 = vadd.f32 %v365, %v814
        %816 = vmatmul.bf16.gmra.mxu0 %v569
        %v817 = vpop.f32.mrf.mxu0
        %v818 = vadd.f32 %v365, %v817
        %v819 = vpop.f32.mrf.mxu0
        %v820 = vadd.f32 %v365, %v819
        %821 = vmatmul.bf16.gmra.mxu0 %v571
        %v822 = vpop.f32.mrf.mxu0
        %v823 = vadd.f32 %v365, %v822
        %v824 = vpop.f32.mrf.mxu0
        %v825 = vadd.f32 %v365, %v824
        %826 = vmatmul.bf16.gmra.mxu0 %v573
        %v827 = vpop.f32.mrf.mxu0
        %v828 = vadd.f32 %v365, %v827
        %v829 = vpop.f32.mrf.mxu0
        %v830 = vadd.f32 %v365, %v829
        %831 = vmatmul.bf16.gmra.mxu0 %v575
        %v832 = vpop.f32.mrf.mxu0
        %v833 = vadd.f32 %v365, %v832
        %v834 = vpop.f32.mrf.mxu0
        %v835 = vadd.f32 %v365, %v834
        %836 = vmatmul.bf16.gmra.mxu0 %v577
        %v837 = vpop.f32.mrf.mxu0
        %v838 = vadd.f32 %v365, %v837
        %v839 = vpop.f32.mrf.mxu0
        %v840 = vadd.f32 %v365, %v839
        %841 = vmatmul.bf16.gmra.mxu0 %v579
        %v842 = vpop.f32.mrf.mxu0
        %v843 = vadd.f32 %v365, %v842
        %v844 = vpop.f32.mrf.mxu0
        %v845 = vadd.f32 %v365, %v844
        %846 = vmatmul.bf16.gmra.mxu0 %v581
        %v847 = vpop.f32.mrf.mxu0
        %v848 = vadd.f32 %v365, %v847
        %v849 = vpop.f32.mrf.mxu0
        %v850 = vadd.f32 %v365, %v849
        %851 = vmatmul.bf16.gmra.mxu0 %v583
        %v852 = vpop.f32.mrf.mxu0
        %v853 = vadd.f32 %v365, %v852
        %v854 = vpop.f32.mrf.mxu0
        %v855 = vadd.f32 %v365, %v854
        %856 = vmatmul.bf16.gmra.mxu0 %v585
        %v857 = vpop.f32.mrf.mxu0
        %v858 = vadd.f32 %v365, %v857
        %v859 = vpop.f32.mrf.mxu0
        %v860 = vadd.f32 %v365, %v859
        %861 = vmatmul.bf16.gmra.mxu0 %v587
        %v862 = vpop.f32.mrf.mxu0
        %v863 = vadd.f32 %v365, %v862
        %v864 = vpop.f32.mrf.mxu0
        %v865 = vadd.f32 %v365, %v864
        %866 = vmatmul.bf16.gmra.mxu0 %v589
        %v867 = vpop.f32.mrf.mxu0
        %v868 = vadd.f32 %v365, %v867
        %v869 = vpop.f32.mrf.mxu0
        %v870 = vadd.f32 %v365, %v869
        %871 = vmatmul.bf16.gmra.mxu0 %v591
        %v872 = vpop.f32.mrf.mxu0
        %v873 = vadd.f32 %v365, %v872
        %v874 = vpop.f32.mrf.mxu0
        %v875 = vadd.f32 %v365, %v874
        %876 = vmatmul.bf16.gmra.mxu0 %v593
        %v877 = vpop.f32.mrf.mxu0
        %v878 = vadd.f32 %v365, %v877
        %v879 = vpop.f32.mrf.mxu0
        %v880 = vadd.f32 %v365, %v879
        %881 = vmatmul.bf16.gmra.mxu0 %v595
        %v882 = vpop.f32.mrf.mxu0
        %v883 = vadd.f32 %v365, %v882
        %v884 = vpop.f32.mrf.mxu0
        %v885 = vadd.f32 %v365, %v884
        %886 = vmatmul.bf16.gmra.mxu0 %v597
        %v887 = vpop.f32.mrf.mxu0
        %v888 = vadd.f32 %v365, %v887
        %v889 = vpop.f32.mrf.mxu0
        %v890 = vadd.f32 %v365, %v889
        %891 = vmatmul.bf16.gmra.mxu0 %v599
        %v892 = vpop.f32.mrf.mxu0
        %v893 = vadd.f32 %v365, %v892
        %v894 = vpop.f32.mrf.mxu0
        %v895 = vadd.f32 %v365, %v894
        %896 = vmatmul.bf16.gmra.mxu0 %v601
        %v897 = vpop.f32.mrf.mxu0
        %v898 = vadd.f32 %v365, %v897
        %v899 = vpop.f32.mrf.mxu0
        %v900 = vadd.f32 %v365, %v899
        %901 = vmatmul.bf16.gmra.mxu0 %v603
        %v902 = vpop.f32.mrf.mxu0
        %v903 = vadd.f32 %v365, %v902
        %v904 = vpop.f32.mrf.mxu0
        %v905 = vadd.f32 %v365, %v904
        %906 = vmatmul.bf16.gmra.mxu0 %v605
        %v907 = vpop.f32.mrf.mxu0
        %v908 = vadd.f32 %v365, %v907
        %v909 = vpop.f32.mrf.mxu0
        %v910 = vadd.f32 %v365, %v909
        %911 = vmatmul.bf16.gmra.mxu0 %v607
        %v912 = vpop.f32.mrf.mxu0
        %v913 = vadd.f32 %v365, %v912
        %v914 = vpop.f32.mrf.mxu0
        %v915 = vadd.f32 %v365, %v914
        %916 = vmatmul.bf16.gmra.mxu0 %v609
        %v917 = vpop.f32.mrf.mxu0
        %v918 = vadd.f32 %v365, %v917
        %v919 = vpop.f32.mrf.mxu0
        %v920 = vadd.f32 %v365, %v919
        %921 = vmatmul.bf16.gmra.mxu0 %v611
        %v922 = vpop.f32.mrf.mxu0
        %v923 = vadd.f32 %v365, %v922
        %v924 = vpop.f32.mrf.mxu0
        %v925 = vadd.f32 %v365, %v924
        %926 = vmatmul.bf16.gmra.mxu0 %v613
        %v927 = vpop.f32.mrf.mxu0
        %v928 = vadd.f32 %v365, %v927
        %v929 = vpop.f32.mrf.mxu0
        %v930 = vadd.f32 %v365, %v929
        %931 = vmatmul.bf16.gmra.mxu0 %v615
        %v932 = vpop.f32.mrf.mxu0
        %v933 = vadd.f32 %v365, %v932
        %v934 = vpop.f32.mrf.mxu0
        %v935 = vadd.f32 %v365, %v934
        %936 = vmatmul.bf16.gmra.mxu0 %v617
        %v937 = vpop.f32.mrf.mxu0
        %v938 = vadd.f32 %v365, %v937
        %v939 = vpop.f32.mrf.mxu0
        %v940 = vadd.f32 %v365, %v939
        %941 = vmatmul.bf16.gmra.mxu0 %v619
        %v942 = vpop.f32.mrf.mxu0
        %v943 = vadd.f32 %v365, %v942
        %v944 = vpop.f32.mrf.mxu0
        %v945 = vadd.f32 %v365, %v944
        %946 = vmatmul.bf16.gmra.mxu0 %v621
        %v947 = vpop.f32.mrf.mxu0
        %v948 = vadd.f32 %v365, %v947
        %v949 = vpop.f32.mrf.mxu0
        %v950 = vadd.f32 %v365, %v949
        %951 = vdwg.mxu0
        %952 = vmatpush.bf16.msra.mxu0 %v766
        %953 = vmatpush.bf16.msra.mxu0 %v765
        %954 = vmatpush.bf16.msra.mxu0 %v764
        %955 = vmatpush.bf16.msra.mxu0 %v763
        %956 = vmatpush.bf16.msra.mxu0 %v762
        %957 = vmatpush.bf16.msra.mxu0 %v761
        %958 = vmatpush.bf16.msra.mxu0 %v760
        %959 = vmatpush.bf16.msra.mxu0 %v759
        %960 = vmatmul.bf16.gmra.mxu0 %v560
        %v961 = vpop.f32.mrf.mxu0
        %v962 = vadd.f32 %v793, %v961
        %v963 = vpop.f32.mrf.mxu0
        %v964 = vadd.f32 %v795, %v963
        %965 = vmatmul.bf16.gmra.mxu0 %v562
        %v966 = vpop.f32.mrf.mxu0
        %v967 = vadd.f32 %v798, %v966
        %v968 = vpop.f32.mrf.mxu0
        %v969 = vadd.f32 %v800, %v968
        %970 = vmatmul.bf16.gmra.mxu0 %v564
        %v971 = vpop.f32.mrf.mxu0
        %v972 = vadd.f32 %v803, %v971
        %v973 = vpop.f32.mrf.mxu0
        %v974 = vadd.f32 %v805, %v973
        %975 = vmatmul.bf16.gmra.mxu0 %v566
        %v976 = vpop.f32.mrf.mxu0
        %v977 = vadd.f32 %v808, %v976
        %v978 = vpop.f32.mrf.mxu0
        %v979 = vadd.f32 %v810, %v978
        %980 = vmatmul.bf16.gmra.mxu0 %v568
        %v981 = vpop.f32.mrf.mxu0
        %v982 = vadd.f32 %v813, %v981
        %v983 = vpop.f32.mrf.mxu0
        %v984 = vadd.f32 %v815, %v983
        %985 = vmatmul.bf16.gmra.mxu0 %v570
        %v986 = vpop.f32.mrf.mxu0
        %v987 = vadd.f32 %v818, %v986
        %v988 = vpop.f32.mrf.mxu0
        %v989 = vadd.f32 %v820, %v988
        %990 = vmatmul.bf16.gmra.mxu0 %v572
        %v991 = vpop.f32.mrf.mxu0
        %v992 = vadd.f32 %v823, %v991
        %v993 = vpop.f32.mrf.mxu0
        %v994 = vadd.f32 %v825, %v993
        %995 = vmatmul.bf16.gmra.mxu0 %v574
        %v996 = vpop.f32.mrf.mxu0
        %v997 = vadd.f32 %v828, %v996
        %v998 = vpop.f32.mrf.mxu0
        %v999 = vadd.f32 %v830, %v998
        %1000 = vmatmul.bf16.gmra.mxu0 %v576
        %v1001 = vpop.f32.mrf.mxu0
        %v1002 = vadd.f32 %v833, %v1001
        %v1003 = vpop.f32.mrf.mxu0
        %v1004 = vadd.f32 %v835, %v1003
        %1005 = vmatmul.bf16.gmra.mxu0 %v578
        %v1006 = vpop.f32.mrf.mxu0
        %v1007 = vadd.f32 %v838, %v1006
        %v1008 = vpop.f32.mrf.mxu0
        %v1009 = vadd.f32 %v840, %v1008
        %1010 = vmatmul.bf16.gmra.mxu0 %v580
        %v1011 = vpop.f32.mrf.mxu0
        %v1012 = vadd.f32 %v843, %v1011
        %v1013 = vpop.f32.mrf.mxu0
        %v1014 = vadd.f32 %v845, %v1013
        %1015 = vmatmul.bf16.gmra.mxu0 %v582
        %v1016 = vpop.f32.mrf.mxu0
        %v1017 = vadd.f32 %v848, %v1016
        %v1018 = vpop.f32.mrf.mxu0
        %v1019 = vadd.f32 %v850, %v1018
        %1020 = vmatmul.bf16.gmra.mxu0 %v584
        %v1021 = vpop.f32.mrf.mxu0
        %v1022 = vadd.f32 %v853, %v1021
        %v1023 = vpop.f32.mrf.mxu0
        %v1024 = vadd.f32 %v855, %v1023
        %1025 = vmatmul.bf16.gmra.mxu0 %v586
        %v1026 = vpop.f32.mrf.mxu0
        %v1027 = vadd.f32 %v858, %v1026
        %v1028 = vpop.f32.mrf.mxu0
        %v1029 = vadd.f32 %v860, %v1028
        %1030 = vmatmul.bf16.gmra.mxu0 %v588
        %v1031 = vpop.f32.mrf.mxu0
        %v1032 = vadd.f32 %v863, %v1031
        %v1033 = vpop.f32.mrf.mxu0
        %v1034 = vadd.f32 %v865, %v1033
        %1035 = vmatmul.bf16.gmra.mxu0 %v590
        %v1036 = vpop.f32.mrf.mxu0
        %v1037 = vadd.f32 %v868, %v1036
        %v1038 = vpop.f32.mrf.mxu0
        %v1039 = vadd.f32 %v870, %v1038
        %1040 = vmatmul.bf16.gmra.mxu0 %v592
        %v1041 = vpop.f32.mrf.mxu0
        %v1042 = vadd.f32 %v873, %v1041
        %v1043 = vpop.f32.mrf.mxu0
        %v1044 = vadd.f32 %v875, %v1043
        %1045 = vmatmul.bf16.gmra.mxu0 %v594
        %v1046 = vpop.f32.mrf.mxu0
        %v1047 = vadd.f32 %v878, %v1046
        %v1048 = vpop.f32.mrf.mxu0
        %v1049 = vadd.f32 %v880, %v1048
        %1050 = vmatmul.bf16.gmra.mxu0 %v596
        %v1051 = vpop.f32.mrf.mxu0
        %v1052 = vadd.f32 %v883, %v1051
        %v1053 = vpop.f32.mrf.mxu0
        %v1054 = vadd.f32 %v885, %v1053
        %1055 = vmatmul.bf16.gmra.mxu0 %v598
        %v1056 = vpop.f32.mrf.mxu0
        %v1057 = vadd.f32 %v888, %v1056
        %v1058 = vpop.f32.mrf.mxu0
        %v1059 = vadd.f32 %v890, %v1058
        %1060 = vmatmul.bf16.gmra.mxu0 %v600
        %v1061 = vpop.f32.mrf.mxu0
        %v1062 = vadd.f32 %v893, %v1061
        %v1063 = vpop.f32.mrf.mxu0
        %v1064 = vadd.f32 %v895, %v1063
        %1065 = vmatmul.bf16.gmra.mxu0 %v602
        %v1066 = vpop.f32.mrf.mxu0
        %v1067 = vadd.f32 %v898, %v1066
        %v1068 = vpop.f32.mrf.mxu0
        %v1069 = vadd.f32 %v900, %v1068
        %1070 = vmatmul.bf16.gmra.mxu0 %v604
        %v1071 = vpop.f32.mrf.mxu0
        %v1072 = vadd.f32 %v903, %v1071
        %v1073 = vpop.f32.mrf.mxu0
        %v1074 = vadd.f32 %v905, %v1073
        %1075 = vmatmul.bf16.gmra.mxu0 %v606
        %v1076 = vpop.f32.mrf.mxu0
        %v1077 = vadd.f32 %v908, %v1076
        %v1078 = vpop.f32.mrf.mxu0
        %v1079 = vadd.f32 %v910, %v1078
        %1080 = vmatmul.bf16.gmra.mxu0 %v608
        %v1081 = vpop.f32.mrf.mxu0
        %v1082 = vadd.f32 %v913, %v1081
        %v1083 = vpop.f32.mrf.mxu0
        %v1084 = vadd.f32 %v915, %v1083
        %1085 = vmatmul.bf16.gmra.mxu0 %v610
        %v1086 = vpop.f32.mrf.mxu0
        %v1087 = vadd.f32 %v918, %v1086
        %v1088 = vpop.f32.mrf.mxu0
        %v1089 = vadd.f32 %v920, %v1088
        %1090 = vmatmul.bf16.gmra.mxu0 %v612
        %v1091 = vpop.f32.mrf.mxu0
        %v1092 = vadd.f32 %v923, %v1091
        %v1093 = vpop.f32.mrf.mxu0
        %v1094 = vadd.f32 %v925, %v1093
        %1095 = vmatmul.bf16.gmra.mxu0 %v614
        %v1096 = vpop.f32.mrf.mxu0
        %v1097 = vadd.f32 %v928, %v1096
        %v1098 = vpop.f32.mrf.mxu0
        %v1099 = vadd.f32 %v930, %v1098
        %1100 = vmatmul.bf16.gmra.mxu0 %v616
        %v1101 = vpop.f32.mrf.mxu0
        %v1102 = vadd.f32 %v933, %v1101
        %v1103 = vpop.f32.mrf.mxu0
        %v1104 = vadd.f32 %v935, %v1103
        %1105 = vmatmul.bf16.gmra.mxu0 %v618
        %v1106 = vpop.f32.mrf.mxu0
        %v1107 = vadd.f32 %v938, %v1106
        %v1108 = vpop.f32.mrf.mxu0
        %v1109 = vadd.f32 %v940, %v1108
        %1110 = vmatmul.bf16.gmra.mxu0 %v620
        %v1111 = vpop.f32.mrf.mxu0
        %v1112 = vadd.f32 %v943, %v1111
        %v1113 = vpop.f32.mrf.mxu0
        %v1114 = vadd.f32 %v945, %v1113
        %1115 = vmatmul.bf16.gmra.mxu0 %v622
        %v1116 = vpop.f32.mrf.mxu0
        %v1117 = vadd.f32 %v948, %v1116
        %v1118 = vpop.f32.mrf.mxu0
        %v1119 = vadd.f32 %v950, %v1118
        %1120 = vdwg.mxu0
        %v1121 = vmax.f32 %v962, 0.0
        %v1122 = vmax.f32 %v964, 0.0
        %v1123 = vmax.f32 %v967, 0.0
        %v1124 = vmax.f32 %v969, 0.0
        %v1125 = vmax.f32 %v972, 0.0
        %v1126 = vmax.f32 %v974, 0.0
        %v1127 = vmax.f32 %v977, 0.0
        %v1128 = vmax.f32 %v979, 0.0
        %v1129 = vmax.f32 %v982, 0.0
        %v1130 = vmax.f32 %v984, 0.0
        %v1131 = vmax.f32 %v987, 0.0
        %v1132 = vmax.f32 %v989, 0.0
        %v1133 = vmax.f32 %v992, 0.0
        %v1134 = vmax.f32 %v994, 0.0
        %v1135 = vmax.f32 %v997, 0.0
        %v1136 = vmax.f32 %v999, 0.0
        %v1137 = vmax.f32 %v1002, 0.0
        %v1138 = vmax.f32 %v1004, 0.0
        %v1139 = vmax.f32 %v1007, 0.0
        %v1140 = vmax.f32 %v1009, 0.0
        %v1141 = vmax.f32 %v1012, 0.0
        %v1142 = vmax.f32 %v1014, 0.0
        %v1143 = vmax.f32 %v1017, 0.0
        %v1144 = vmax.f32 %v1019, 0.0
        %v1145 = vmax.f32 %v1022, 0.0
        %v1146 = vmax.f32 %v1024, 0.0
        %v1147 = vmax.f32 %v1027, 0.0
        %v1148 = vmax.f32 %v1029, 0.0
        %v1149 = vmax.f32 %v1032, 0.0
        %v1150 = vmax.f32 %v1034, 0.0
        %v1151 = vmax.f32 %v1037, 0.0
        %v1152 = vmax.f32 %v1039, 0.0
        %v1153 = vmax.f32 %v1042, 0.0
        %v1154 = vmax.f32 %v1044, 0.0
        %v1155 = vmax.f32 %v1047, 0.0
        %v1156 = vmax.f32 %v1049, 0.0
        %v1157 = vmax.f32 %v1052, 0.0
        %v1158 = vmax.f32 %v1054, 0.0
        %v1159 = vmax.f32 %v1057, 0.0
        %v1160 = vmax.f32 %v1059, 0.0
        %v1161 = vmax.f32 %v1062, 0.0
        %v1162 = vmax.f32 %v1064, 0.0
        %v1163 = vmax.f32 %v1067, 0.0
        %v1164 = vmax.f32 %v1069, 0.0
        %v1165 = vmax.f32 %v1072, 0.0
        %v1166 = vmax.f32 %v1074, 0.0
        %v1167 = vmax.f32 %v1077, 0.0
        %v1168 = vmax.f32 %v1079, 0.0
        %v1169 = vmax.f32 %v1082, 0.0
        %v1170 = vmax.f32 %v1084, 0.0
        %v1171 = vmax.f32 %v1087, 0.0
        %v1172 = vmax.f32 %v1089, 0.0
        %v1173 = vmax.f32 %v1092, 0.0
        %v1174 = vmax.f32 %v1094, 0.0
        %v1175 = vmax.f32 %v1097, 0.0
        %v1176 = vmax.f32 %v1099, 0.0
        %v1177 = vmax.f32 %v1102, 0.0
        %v1178 = vmax.f32 %v1104, 0.0
        %v1179 = vmax.f32 %v1107, 0.0
        %v1180 = vmax.f32 %v1109, 0.0
        %v1181 = vmax.f32 %v1112, 0.0
        %v1182 = vmax.f32 %v1114, 0.0
        %v1183 = vmax.f32 %v1117, 0.0
        %v1184 = vmax.f32 %v1119, 0.0
        %v1185 = vpack.c.bf16 %v1122, %v1121
        %v1186 = vpack.c.bf16 %v1124, %v1123
        %v1187 = vpack.c.bf16 %v1126, %v1125
        %v1188 = vpack.c.bf16 %v1128, %v1127
        %v1189 = vpack.c.bf16 %v1130, %v1129
        %v1190 = vpack.c.bf16 %v1132, %v1131
        %v1191 = vpack.c.bf16 %v1134, %v1133
        %v1192 = vpack.c.bf16 %v1136, %v1135
        %v1193 = vpack.c.bf16 %v1138, %v1137
        %v1194 = vpack.c.bf16 %v1140, %v1139
        %v1195 = vpack.c.bf16 %v1142, %v1141
        %v1196 = vpack.c.bf16 %v1144, %v1143
        %v1197 = vpack.c.bf16 %v1146, %v1145
        %v1198 = vpack.c.bf16 %v1148, %v1147
        %v1199 = vpack.c.bf16 %v1150, %v1149
        %v1200 = vpack.c.bf16 %v1152, %v1151
        %v1201 = vpack.c.bf16 %v1154, %v1153
        %v1202 = vpack.c.bf16 %v1156, %v1155
        %v1203 = vpack.c.bf16 %v1158, %v1157
        %v1204 = vpack.c.bf16 %v1160, %v1159
        %v1205 = vpack.c.bf16 %v1162, %v1161
        %v1206 = vpack.c.bf16 %v1164, %v1163
        %v1207 = vpack.c.bf16 %v1166, %v1165
        %v1208 = vpack.c.bf16 %v1168, %v1167
        %v1209 = vpack.c.bf16 %v1170, %v1169
        %v1210 = vpack.c.bf16 %v1172, %v1171
        %v1211 = vpack.c.bf16 %v1174, %v1173
        %v1212 = vpack.c.bf16 %v1176, %v1175
        %v1213 = vpack.c.bf16 %v1178, %v1177
        %v1214 = vpack.c.bf16 %v1180, %v1179
        %v1215 = vpack.c.bf16 %v1182, %v1181
        %v1216 = vpack.c.bf16 %v1184, %v1183
        %v1217 = vld [vmem:[%s3] sm:$0xf]
        %v1218 = vld [vmem:[%s3 + $0x4] sm:$0xf]
        %v1219 = vld [vmem:[%s3 + $0x8] sm:$0xf]
        %v1220 = vld [vmem:[%s3 + $0xc] sm:$0xf]
        %v1221 = vld [vmem:[%s3 + $0x10] sm:$0xf]
        %v1222 = vld [vmem:[%s3 + $0x14] sm:$0xf]
        %v1223 = vld [vmem:[%s3 + $0x18] sm:$0xf]
        %v1224 = vld [vmem:[%s3 + $0x1c] sm:$0xf]
        %v1225 = vld [vmem:[%s3 + $0x20] sm:$0xf]
        %v1226 = vld [vmem:[%s3 + $0x24] sm:$0xf]
        %v1227 = vld [vmem:[%s3 + $0x28] sm:$0xf]
        %v1228 = vld [vmem:[%s3 + $0x2c] sm:$0xf]
        %v1229 = vld [vmem:[%s3 + $0x30] sm:$0xf]
        %v1230 = vld [vmem:[%s3 + $0x34] sm:$0xf]
        %v1231 = vld [vmem:[%s3 + $0x38] sm:$0xf]
        %v1232 = vld [vmem:[%s3 + $0x3c] sm:$0xf]
        %v1233 = vld [vmem:[%s4] sm:$0x1]
        %v1235 = vperm.slane %v1233, 0
        %v1253 = vunpack.c.l.b16 %v1217
        %v1254 = vunpack.c.l.b16 %v1218
        %v1255 = vunpack.c.l.b16 %v1219
        %v1256 = vunpack.c.l.b16 %v1220
        %v1257 = vunpack.c.l.b16 %v1221
        %v1258 = vunpack.c.l.b16 %v1222
        %v1259 = vunpack.c.l.b16 %v1223
        %v1260 = vunpack.c.l.b16 %v1224
        %v1261 = vunpack.c.l.b16 %v1225
        %v1262 = vunpack.c.l.b16 %v1226
        %v1263 = vunpack.c.l.b16 %v1227
        %v1264 = vunpack.c.l.b16 %v1228
        %v1265 = vunpack.c.l.b16 %v1229
        %v1266 = vunpack.c.l.b16 %v1230
        %v1267 = vunpack.c.l.b16 %v1231
        %v1268 = vunpack.c.l.b16 %v1232
        %v1269 = vpack.c.b16 %v1254, %v1253
        %v1270 = vpack.c.b16 %v1256, %v1255
        %v1271 = vpack.c.b16 %v1258, %v1257
        %v1272 = vpack.c.b16 %v1260, %v1259
        %v1273 = vpack.c.b16 %v1262, %v1261
        %v1274 = vpack.c.b16 %v1264, %v1263
        %v1275 = vpack.c.b16 %v1266, %v1265
        %v1276 = vpack.c.b16 %v1268, %v1267
        %1285 = vmatpush.bf16.msra.mxu0 %v1276
        %1286 = vmatpush.bf16.msra.mxu0 %v1275
        %1287 = vmatpush.bf16.msra.mxu0 %v1274
        %1288 = vmatpush.bf16.msra.mxu0 %v1273
        %1289 = vmatpush.bf16.msra.mxu0 %v1272
        %1290 = vmatpush.bf16.msra.mxu0 %v1271
        %1291 = vmatpush.bf16.msra.mxu0 %v1270
        %1292 = vmatpush.bf16.msra.mxu0 %v1269
        %1293 = vmatmul.bf16.gmra.mxu0 %v1185
        %v1294 = vpop.f32.mrf.mxu0
        %v1295 = vadd.f32 %v1235, %v1294
        %v1296 = vpop.f32.mrf.mxu0
        %v1297 = vadd.f32 %v1235, %v1296
        %1298 = vmatmul.bf16.gmra.mxu0 %v1186
        %v1299 = vpop.f32.mrf.mxu0
        %v1300 = vadd.f32 %v1235, %v1299
        %v1301 = vpop.f32.mrf.mxu0
        %v1302 = vadd.f32 %v1235, %v1301
        %1303 = vmatmul.bf16.gmra.mxu0 %v1187
        %v1304 = vpop.f32.mrf.mxu0
        %v1305 = vadd.f32 %v1235, %v1304
        %v1306 = vpop.f32.mrf.mxu0
        %v1307 = vadd.f32 %v1235, %v1306
        %1308 = vmatmul.bf16.gmra.mxu0 %v1188
        %v1309 = vpop.f32.mrf.mxu0
        %v1310 = vadd.f32 %v1235, %v1309
        %v1311 = vpop.f32.mrf.mxu0
        %v1312 = vadd.f32 %v1235, %v1311
        %1313 = vmatmul.bf16.gmra.mxu0 %v1189
        %v1314 = vpop.f32.mrf.mxu0
        %v1315 = vadd.f32 %v1235, %v1314
        %v1316 = vpop.f32.mrf.mxu0
        %v1317 = vadd.f32 %v1235, %v1316
        %1318 = vmatmul.bf16.gmra.mxu0 %v1190
        %v1319 = vpop.f32.mrf.mxu0
        %v1320 = vadd.f32 %v1235, %v1319
        %v1321 = vpop.f32.mrf.mxu0
        %v1322 = vadd.f32 %v1235, %v1321
        %1323 = vmatmul.bf16.gmra.mxu0 %v1191
        %v1324 = vpop.f32.mrf.mxu0
        %v1325 = vadd.f32 %v1235, %v1324
        %v1326 = vpop.f32.mrf.mxu0
        %v1327 = vadd.f32 %v1235, %v1326
        %1328 = vmatmul.bf16.gmra.mxu0 %v1192
        %v1329 = vpop.f32.mrf.mxu0
        %v1330 = vadd.f32 %v1235, %v1329
        %v1331 = vpop.f32.mrf.mxu0
        %v1332 = vadd.f32 %v1235, %v1331
        %1333 = vmatmul.bf16.gmra.mxu0 %v1193
        %v1334 = vpop.f32.mrf.mxu0
        %v1335 = vadd.f32 %v1235, %v1334
        %v1336 = vpop.f32.mrf.mxu0
        %v1337 = vadd.f32 %v1235, %v1336
        %1338 = vmatmul.bf16.gmra.mxu0 %v1194
        %v1339 = vpop.f32.mrf.mxu0
        %v1340 = vadd.f32 %v1235, %v1339
        %v1341 = vpop.f32.mrf.mxu0
        %v1342 = vadd.f32 %v1235, %v1341
        %1343 = vmatmul.bf16.gmra.mxu0 %v1195
        %v1344 = vpop.f32.mrf.mxu0
        %v1345 = vadd.f32 %v1235, %v1344
        %v1346 = vpop.f32.mrf.mxu0
        %v1347 = vadd.f32 %v1235, %v1346
        %1348 = vmatmul.bf16.gmra.mxu0 %v1196
        %v1349 = vpop.f32.mrf.mxu0
        %v1350 = vadd.f32 %v1235, %v1349
        %v1351 = vpop.f32.mrf.mxu0
        %v1352 = vadd.f32 %v1235, %v1351
        %1353 = vmatmul.bf16.gmra.mxu0 %v1197
        %v1354 = vpop.f32.mrf.mxu0
        %v1355 = vadd.f32 %v1235, %v1354
        %v1356 = vpop.f32.mrf.mxu0
        %v1357 = vadd.f32 %v1235, %v1356
        %1358 = vmatmul.bf16.gmra.mxu0 %v1198
        %v1359 = vpop.f32.mrf.mxu0
        %v1360 = vadd.f32 %v1235, %v1359
        %v1361 = vpop.f32.mrf.mxu0
        %v1362 = vadd.f32 %v1235, %v1361
        %1363 = vmatmul.bf16.gmra.mxu0 %v1199
        %v1364 = vpop.f32.mrf.mxu0
        %v1365 = vadd.f32 %v1235, %v1364
        %v1366 = vpop.f32.mrf.mxu0
        %v1367 = vadd.f32 %v1235, %v1366
        %1368 = vmatmul.bf16.gmra.mxu0 %v1200
        %v1369 = vpop.f32.mrf.mxu0
        %v1370 = vadd.f32 %v1235, %v1369
        %v1371 = vpop.f32.mrf.mxu0
        %v1372 = vadd.f32 %v1235, %v1371
        %1373 = vmatmul.bf16.gmra.mxu0 %v1201
        %v1374 = vpop.f32.mrf.mxu0
        %v1375 = vadd.f32 %v1235, %v1374
        %v1376 = vpop.f32.mrf.mxu0
        %v1377 = vadd.f32 %v1235, %v1376
        %1378 = vmatmul.bf16.gmra.mxu0 %v1202
        %v1379 = vpop.f32.mrf.mxu0
        %v1380 = vadd.f32 %v1235, %v1379
        %v1381 = vpop.f32.mrf.mxu0
        %v1382 = vadd.f32 %v1235, %v1381
        %1383 = vmatmul.bf16.gmra.mxu0 %v1203
        %v1384 = vpop.f32.mrf.mxu0
        %v1385 = vadd.f32 %v1235, %v1384
        %v1386 = vpop.f32.mrf.mxu0
        %v1387 = vadd.f32 %v1235, %v1386
        %1388 = vmatmul.bf16.gmra.mxu0 %v1204
        %v1389 = vpop.f32.mrf.mxu0
        %v1390 = vadd.f32 %v1235, %v1389
        %v1391 = vpop.f32.mrf.mxu0
        %v1392 = vadd.f32 %v1235, %v1391
        %1393 = vmatmul.bf16.gmra.mxu0 %v1205
        %v1394 = vpop.f32.mrf.mxu0
        %v1395 = vadd.f32 %v1235, %v1394
        %v1396 = vpop.f32.mrf.mxu0
        %v1397 = vadd.f32 %v1235, %v1396
        %1398 = vmatmul.bf16.gmra.mxu0 %v1206
        %v1399 = vpop.f32.mrf.mxu0
        %v1400 = vadd.f32 %v1235, %v1399
        %v1401 = vpop.f32.mrf.mxu0
        %v1402 = vadd.f32 %v1235, %v1401
        %1403 = vmatmul.bf16.gmra.mxu0 %v1207
        %v1404 = vpop.f32.mrf.mxu0
        %v1405 = vadd.f32 %v1235, %v1404
        %v1406 = vpop.f32.mrf.mxu0
        %v1407 = vadd.f32 %v1235, %v1406
        %1408 = vmatmul.bf16.gmra.mxu0 %v1208
        %v1409 = vpop.f32.mrf.mxu0
        %v1410 = vadd.f32 %v1235, %v1409
        %v1411 = vpop.f32.mrf.mxu0
        %v1412 = vadd.f32 %v1235, %v1411
        %1413 = vmatmul.bf16.gmra.mxu0 %v1209
        %v1414 = vpop.f32.mrf.mxu0
        %v1415 = vadd.f32 %v1235, %v1414
        %v1416 = vpop.f32.mrf.mxu0
        %v1417 = vadd.f32 %v1235, %v1416
        %1418 = vmatmul.bf16.gmra.mxu0 %v1210
        %v1419 = vpop.f32.mrf.mxu0
        %v1420 = vadd.f32 %v1235, %v1419
        %v1421 = vpop.f32.mrf.mxu0
        %v1422 = vadd.f32 %v1235, %v1421
        %1423 = vmatmul.bf16.gmra.mxu0 %v1211
        %v1424 = vpop.f32.mrf.mxu0
        %v1425 = vadd.f32 %v1235, %v1424
        %v1426 = vpop.f32.mrf.mxu0
        %v1427 = vadd.f32 %v1235, %v1426
        %1428 = vmatmul.bf16.gmra.mxu0 %v1212
        %v1429 = vpop.f32.mrf.mxu0
        %v1430 = vadd.f32 %v1235, %v1429
        %v1431 = vpop.f32.mrf.mxu0
        %v1432 = vadd.f32 %v1235, %v1431
        %1433 = vmatmul.bf16.gmra.mxu0 %v1213
        %v1434 = vpop.f32.mrf.mxu0
        %v1435 = vadd.f32 %v1235, %v1434
        %v1436 = vpop.f32.mrf.mxu0
        %v1437 = vadd.f32 %v1235, %v1436
        %1438 = vmatmul.bf16.gmra.mxu0 %v1214
        %v1439 = vpop.f32.mrf.mxu0
        %v1440 = vadd.f32 %v1235, %v1439
        %v1441 = vpop.f32.mrf.mxu0
        %v1442 = vadd.f32 %v1235, %v1441
        %1443 = vmatmul.bf16.gmra.mxu0 %v1215
        %v1444 = vpop.f32.mrf.mxu0
        %v1445 = vadd.f32 %v1235, %v1444
        %v1446 = vpop.f32.mrf.mxu0
        %v1447 = vadd.f32 %v1235, %v1446
        %1448 = vmatmul.bf16.gmra.mxu0 %v1216
        %v1449 = vpop.f32.mrf.mxu0
        %v1450 = vadd.f32 %v1235, %v1449
        %v1451 = vpop.f32.mrf.mxu0
        %v1452 = vadd.f32 %v1235, %v1451
        %1453 = vdwg.mxu0
        %vm1454 = vcmask 64512
        %v1455 = vsel %vm1454, %v1295, -inf
        %1456 = vmax.xlane.f32.xlu0 %v1455
        %v1457 = vpop.xlane.xlu0 %1456
        %v1458 = vsel %vm1454, %v1297, -inf
        %1459 = vmax.xlane.f32.xlu0 %v1458
        %v1460 = vpop.xlane.xlu0 %1459
        %v1461 = vsel %vm1454, %v1300, -inf
        %1462 = vmax.xlane.f32.xlu0 %v1461
        %v1463 = vpop.xlane.xlu0 %1462
        %v1464 = vsel %vm1454, %v1302, -inf
        %1465 = vmax.xlane.f32.xlu0 %v1464
        %v1466 = vpop.xlane.xlu0 %1465
        %v1467 = vsel %vm1454, %v1305, -inf
        %1468 = vmax.xlane.f32.xlu0 %v1467
        %v1469 = vpop.xlane.xlu0 %1468
        %v1470 = vsel %vm1454, %v1307, -inf
        %1471 = vmax.xlane.f32.xlu0 %v1470
        %v1472 = vpop.xlane.xlu0 %1471
        %v1473 = vsel %vm1454, %v1310, -inf
        %1474 = vmax.xlane.f32.xlu0 %v1473
        %v1475 = vpop.xlane.xlu0 %1474
        %v1476 = vsel %vm1454, %v1312, -inf
        %1477 = vmax.xlane.f32.xlu0 %v1476
        %v1478 = vpop.xlane.xlu0 %1477
        %v1479 = vsel %vm1454, %v1315, -inf
        %1480 = vmax.xlane.f32.xlu0 %v1479
        %v1481 = vpop.xlane.xlu0 %1480
        %v1482 = vsel %vm1454, %v1317, -inf
        %1483 = vmax.xlane.f32.xlu0 %v1482
        %v1484 = vpop.xlane.xlu0 %1483
        %v1485 = vsel %vm1454, %v1320, -inf
        %1486 = vmax.xlane.f32.xlu0 %v1485
        %v1487 = vpop.xlane.xlu0 %1486
        %v1488 = vsel %vm1454, %v1322, -inf
        %1489 = vmax.xlane.f32.xlu0 %v1488
        %v1490 = vpop.xlane.xlu0 %1489
        %v1491 = vsel %vm1454, %v1325, -inf
        %1492 = vmax.xlane.f32.xlu0 %v1491
        %v1493 = vpop.xlane.xlu0 %1492
        %v1494 = vsel %vm1454, %v1327, -inf
        %1495 = vmax.xlane.f32.xlu0 %v1494
        %v1496 = vpop.xlane.xlu0 %1495
        %v1497 = vsel %vm1454, %v1330, -inf
        %1498 = vmax.xlane.f32.xlu0 %v1497
        %v1499 = vpop.xlane.xlu0 %1498
        %v1500 = vsel %vm1454, %v1332, -inf
        %1501 = vmax.xlane.f32.xlu0 %v1500
        %v1502 = vpop.xlane.xlu0 %1501
        %v1503 = vsel %vm1454, %v1335, -inf
        %1504 = vmax.xlane.f32.xlu0 %v1503
        %v1505 = vpop.xlane.xlu0 %1504
        %v1506 = vsel %vm1454, %v1337, -inf
        %1507 = vmax.xlane.f32.xlu0 %v1506
        %v1508 = vpop.xlane.xlu0 %1507
        %v1509 = vsel %vm1454, %v1340, -inf
        %1510 = vmax.xlane.f32.xlu0 %v1509
        %v1511 = vpop.xlane.xlu0 %1510
        %v1512 = vsel %vm1454, %v1342, -inf
        %1513 = vmax.xlane.f32.xlu0 %v1512
        %v1514 = vpop.xlane.xlu0 %1513
        %v1515 = vsel %vm1454, %v1345, -inf
        %1516 = vmax.xlane.f32.xlu0 %v1515
        %v1517 = vpop.xlane.xlu0 %1516
        %v1518 = vsel %vm1454, %v1347, -inf
        %1519 = vmax.xlane.f32.xlu0 %v1518
        %v1520 = vpop.xlane.xlu0 %1519
        %v1521 = vsel %vm1454, %v1350, -inf
        %1522 = vmax.xlane.f32.xlu0 %v1521
        %v1523 = vpop.xlane.xlu0 %1522
        %v1524 = vsel %vm1454, %v1352, -inf
        %1525 = vmax.xlane.f32.xlu0 %v1524
        %v1526 = vpop.xlane.xlu0 %1525
        %v1527 = vsel %vm1454, %v1355, -inf
        %1528 = vmax.xlane.f32.xlu0 %v1527
        %v1529 = vpop.xlane.xlu0 %1528
        %v1530 = vsel %vm1454, %v1357, -inf
        %1531 = vmax.xlane.f32.xlu0 %v1530
        %v1532 = vpop.xlane.xlu0 %1531
        %v1533 = vsel %vm1454, %v1360, -inf
        %1534 = vmax.xlane.f32.xlu0 %v1533
        %v1535 = vpop.xlane.xlu0 %1534
        %v1536 = vsel %vm1454, %v1362, -inf
        %1537 = vmax.xlane.f32.xlu0 %v1536
        %v1538 = vpop.xlane.xlu0 %1537
        %v1539 = vsel %vm1454, %v1365, -inf
        %1540 = vmax.xlane.f32.xlu0 %v1539
        %v1541 = vpop.xlane.xlu0 %1540
        %v1542 = vsel %vm1454, %v1367, -inf
        %1543 = vmax.xlane.f32.xlu0 %v1542
        %v1544 = vpop.xlane.xlu0 %1543
        %v1545 = vsel %vm1454, %v1370, -inf
        %1546 = vmax.xlane.f32.xlu0 %v1545
        %v1547 = vpop.xlane.xlu0 %1546
        %v1548 = vsel %vm1454, %v1372, -inf
        %1549 = vmax.xlane.f32.xlu0 %v1548
        %v1550 = vpop.xlane.xlu0 %1549
        %v1551 = vsel %vm1454, %v1375, -inf
        %1552 = vmax.xlane.f32.xlu0 %v1551
        %v1553 = vpop.xlane.xlu0 %1552
        %v1554 = vsel %vm1454, %v1377, -inf
        %1555 = vmax.xlane.f32.xlu0 %v1554
        %v1556 = vpop.xlane.xlu0 %1555
        %v1557 = vsel %vm1454, %v1380, -inf
        %1558 = vmax.xlane.f32.xlu0 %v1557
        %v1559 = vpop.xlane.xlu0 %1558
        %v1560 = vsel %vm1454, %v1382, -inf
        %1561 = vmax.xlane.f32.xlu0 %v1560
        %v1562 = vpop.xlane.xlu0 %1561
        %v1563 = vsel %vm1454, %v1385, -inf
        %1564 = vmax.xlane.f32.xlu0 %v1563
        %v1565 = vpop.xlane.xlu0 %1564
        %v1566 = vsel %vm1454, %v1387, -inf
        %1567 = vmax.xlane.f32.xlu0 %v1566
        %v1568 = vpop.xlane.xlu0 %1567
        %v1569 = vsel %vm1454, %v1390, -inf
        %1570 = vmax.xlane.f32.xlu0 %v1569
        %v1571 = vpop.xlane.xlu0 %1570
        %v1572 = vsel %vm1454, %v1392, -inf
        %1573 = vmax.xlane.f32.xlu0 %v1572
        %v1574 = vpop.xlane.xlu0 %1573
        %v1575 = vsel %vm1454, %v1395, -inf
        %1576 = vmax.xlane.f32.xlu0 %v1575
        %v1577 = vpop.xlane.xlu0 %1576
        %v1578 = vsel %vm1454, %v1397, -inf
        %1579 = vmax.xlane.f32.xlu0 %v1578
        %v1580 = vpop.xlane.xlu0 %1579
        %v1581 = vsel %vm1454, %v1400, -inf
        %1582 = vmax.xlane.f32.xlu0 %v1581
        %v1583 = vpop.xlane.xlu0 %1582
        %v1584 = vsel %vm1454, %v1402, -inf
        %1585 = vmax.xlane.f32.xlu0 %v1584
        %v1586 = vpop.xlane.xlu0 %1585
        %v1587 = vsel %vm1454, %v1405, -inf
        %1588 = vmax.xlane.f32.xlu0 %v1587
        %v1589 = vpop.xlane.xlu0 %1588
        %v1590 = vsel %vm1454, %v1407, -inf
        %1591 = vmax.xlane.f32.xlu0 %v1590
        %v1592 = vpop.xlane.xlu0 %1591
        %v1593 = vsel %vm1454, %v1410, -inf
        %1594 = vmax.xlane.f32.xlu0 %v1593
        %v1595 = vpop.xlane.xlu0 %1594
        %v1596 = vsel %vm1454, %v1412, -inf
        %1597 = vmax.xlane.f32.xlu0 %v1596
        %v1598 = vpop.xlane.xlu0 %1597
        %v1599 = vsel %vm1454, %v1415, -inf
        %1600 = vmax.xlane.f32.xlu0 %v1599
        %v1601 = vpop.xlane.xlu0 %1600
        %v1602 = vsel %vm1454, %v1417, -inf
        %1603 = vmax.xlane.f32.xlu0 %v1602
        %v1604 = vpop.xlane.xlu0 %1603
        %v1605 = vsel %vm1454, %v1420, -inf
        %1606 = vmax.xlane.f32.xlu0 %v1605
        %v1607 = vpop.xlane.xlu0 %1606
        %v1608 = vsel %vm1454, %v1422, -inf
        %1609 = vmax.xlane.f32.xlu0 %v1608
        %v1610 = vpop.xlane.xlu0 %1609
        %v1611 = vsel %vm1454, %v1425, -inf
        %1612 = vmax.xlane.f32.xlu0 %v1611
        %v1613 = vpop.xlane.xlu0 %1612
        %v1614 = vsel %vm1454, %v1427, -inf
        %1615 = vmax.xlane.f32.xlu0 %v1614
        %v1616 = vpop.xlane.xlu0 %1615
        %v1617 = vsel %vm1454, %v1430, -inf
        %1618 = vmax.xlane.f32.xlu0 %v1617
        %v1619 = vpop.xlane.xlu0 %1618
        %v1620 = vsel %vm1454, %v1432, -inf
        %1621 = vmax.xlane.f32.xlu0 %v1620
        %v1622 = vpop.xlane.xlu0 %1621
        %v1623 = vsel %vm1454, %v1435, -inf
        %1624 = vmax.xlane.f32.xlu0 %v1623
        %v1625 = vpop.xlane.xlu0 %1624
        %v1626 = vsel %vm1454, %v1437, -inf
        %1627 = vmax.xlane.f32.xlu0 %v1626
        %v1628 = vpop.xlane.xlu0 %1627
        %v1629 = vsel %vm1454, %v1440, -inf
        %1630 = vmax.xlane.f32.xlu0 %v1629
        %v1631 = vpop.xlane.xlu0 %1630
        %v1632 = vsel %vm1454, %v1442, -inf
        %1633 = vmax.xlane.f32.xlu0 %v1632
        %v1634 = vpop.xlane.xlu0 %1633
        %v1635 = vsel %vm1454, %v1445, -inf
        %1636 = vmax.xlane.f32.xlu0 %v1635
        %v1637 = vpop.xlane.xlu0 %1636
        %v1638 = vsel %vm1454, %v1447, -inf
        %1639 = vmax.xlane.f32.xlu0 %v1638
        %v1640 = vpop.xlane.xlu0 %1639
        %v1641 = vsel %vm1454, %v1450, -inf
        %1642 = vmax.xlane.f32.xlu0 %v1641
        %v1643 = vpop.xlane.xlu0 %1642
        %v1644 = vsel %vm1454, %v1452, -inf
        %1645 = vmax.xlane.f32.xlu0 %v1644
        %v1646 = vpop.xlane.xlu0 %1645
        %v1647 = vsub.f32 %v1295, %v1457
        %v1648 = vsub.f32 %v1297, %v1460
        %v1649 = vsub.f32 %v1300, %v1463
        %v1650 = vsub.f32 %v1302, %v1466
        %v1651 = vsub.f32 %v1305, %v1469
        %v1652 = vsub.f32 %v1307, %v1472
        %v1653 = vsub.f32 %v1310, %v1475
        %v1654 = vsub.f32 %v1312, %v1478
        %v1655 = vsub.f32 %v1315, %v1481
        %v1656 = vsub.f32 %v1317, %v1484
        %v1657 = vsub.f32 %v1320, %v1487
        %v1658 = vsub.f32 %v1322, %v1490
        %v1659 = vsub.f32 %v1325, %v1493
        %v1660 = vsub.f32 %v1327, %v1496
        %v1661 = vsub.f32 %v1330, %v1499
        %v1662 = vsub.f32 %v1332, %v1502
        %v1663 = vsub.f32 %v1335, %v1505
        %v1664 = vsub.f32 %v1337, %v1508
        %v1665 = vsub.f32 %v1340, %v1511
        %v1666 = vsub.f32 %v1342, %v1514
        %v1667 = vsub.f32 %v1345, %v1517
        %v1668 = vsub.f32 %v1347, %v1520
        %v1669 = vsub.f32 %v1350, %v1523
        %v1670 = vsub.f32 %v1352, %v1526
        %v1671 = vsub.f32 %v1355, %v1529
        %v1672 = vsub.f32 %v1357, %v1532
        %v1673 = vsub.f32 %v1360, %v1535
        %v1674 = vsub.f32 %v1362, %v1538
        %v1675 = vsub.f32 %v1365, %v1541
        %v1676 = vsub.f32 %v1367, %v1544
        %v1677 = vsub.f32 %v1370, %v1547
        %v1678 = vsub.f32 %v1372, %v1550
        %v1679 = vsub.f32 %v1375, %v1553
        %v1680 = vsub.f32 %v1377, %v1556
        %v1681 = vsub.f32 %v1380, %v1559
        %v1682 = vsub.f32 %v1382, %v1562
        %v1683 = vsub.f32 %v1385, %v1565
        %v1684 = vsub.f32 %v1387, %v1568
        %v1685 = vsub.f32 %v1390, %v1571
        %v1686 = vsub.f32 %v1392, %v1574
        %v1687 = vsub.f32 %v1395, %v1577
        %v1688 = vsub.f32 %v1397, %v1580
        %v1689 = vsub.f32 %v1400, %v1583
        %v1690 = vsub.f32 %v1402, %v1586
        %v1691 = vsub.f32 %v1405, %v1589
        %v1692 = vsub.f32 %v1407, %v1592
        %v1693 = vsub.f32 %v1410, %v1595
        %v1694 = vsub.f32 %v1412, %v1598
        %v1695 = vsub.f32 %v1415, %v1601
        %v1696 = vsub.f32 %v1417, %v1604
        %v1697 = vsub.f32 %v1420, %v1607
        %v1698 = vsub.f32 %v1422, %v1610
        %v1699 = vsub.f32 %v1425, %v1613
        %v1700 = vsub.f32 %v1427, %v1616
        %v1701 = vsub.f32 %v1430, %v1619
        %v1702 = vsub.f32 %v1432, %v1622
        %v1703 = vsub.f32 %v1435, %v1625
        %v1704 = vsub.f32 %v1437, %v1628
        %v1705 = vsub.f32 %v1440, %v1631
        %v1706 = vsub.f32 %v1442, %v1634
        %v1707 = vsub.f32 %v1445, %v1637
        %v1708 = vsub.f32 %v1447, %v1640
        %v1709 = vsub.f32 %v1450, %v1643
        %v1710 = vsub.f32 %v1452, %v1646
        %v1711 = vmul.f32 %v1647, 1.442695
        %v1712 = vpow.pop %v1711
        %v1713 = vmul.f32 %v1648, 1.442695
        %v1714 = vpow.pop %v1713
        %v1715 = vmul.f32 %v1649, 1.442695
        %v1716 = vpow.pop %v1715
        %v1717 = vmul.f32 %v1650, 1.442695
        %v1718 = vpow.pop %v1717
        %v1719 = vmul.f32 %v1651, 1.442695
        %v1720 = vpow.pop %v1719
        %v1721 = vmul.f32 %v1652, 1.442695
        %v1722 = vpow.pop %v1721
        %v1723 = vmul.f32 %v1653, 1.442695
        %v1724 = vpow.pop %v1723
        %v1725 = vmul.f32 %v1654, 1.442695
        %v1726 = vpow.pop %v1725
        %v1727 = vmul.f32 %v1655, 1.442695
        %v1728 = vpow.pop %v1727
        %v1729 = vmul.f32 %v1656, 1.442695
        %v1730 = vpow.pop %v1729
        %v1731 = vmul.f32 %v1657, 1.442695
        %v1732 = vpow.pop %v1731
        %v1733 = vmul.f32 %v1658, 1.442695
        %v1734 = vpow.pop %v1733
        %v1735 = vmul.f32 %v1659, 1.442695
        %v1736 = vpow.pop %v1735
        %v1737 = vmul.f32 %v1660, 1.442695
        %v1738 = vpow.pop %v1737
        %v1739 = vmul.f32 %v1661, 1.442695
        %v1740 = vpow.pop %v1739
        %v1741 = vmul.f32 %v1662, 1.442695
        %v1742 = vpow.pop %v1741
        %v1743 = vmul.f32 %v1663, 1.442695
        %v1744 = vpow.pop %v1743
        %v1745 = vmul.f32 %v1664, 1.442695
        %v1746 = vpow.pop %v1745
        %v1747 = vmul.f32 %v1665, 1.442695
        %v1748 = vpow.pop %v1747
        %v1749 = vmul.f32 %v1666, 1.442695
        %v1750 = vpow.pop %v1749
        %v1751 = vmul.f32 %v1667, 1.442695
        %v1752 = vpow.pop %v1751
        %v1753 = vmul.f32 %v1668, 1.442695
        %v1754 = vpow.pop %v1753
        %v1755 = vmul.f32 %v1669, 1.442695
        %v1756 = vpow.pop %v1755
        %v1757 = vmul.f32 %v1670, 1.442695
        %v1758 = vpow.pop %v1757
        %v1759 = vmul.f32 %v1671, 1.442695
        %v1760 = vpow.pop %v1759
        %v1761 = vmul.f32 %v1672, 1.442695
        %v1762 = vpow.pop %v1761
        %v1763 = vmul.f32 %v1673, 1.442695
        %v1764 = vpow.pop %v1763
        %v1765 = vmul.f32 %v1674, 1.442695
        %v1766 = vpow.pop %v1765
        %v1767 = vmul.f32 %v1675, 1.442695
        %v1768 = vpow.pop %v1767
        %v1769 = vmul.f32 %v1676, 1.442695
        %v1770 = vpow.pop %v1769
        %v1771 = vmul.f32 %v1677, 1.442695
        %v1772 = vpow.pop %v1771
        %v1773 = vmul.f32 %v1678, 1.442695
        %v1774 = vpow.pop %v1773
        %v1775 = vmul.f32 %v1679, 1.442695
        %v1776 = vpow.pop %v1775
        %v1777 = vmul.f32 %v1680, 1.442695
        %v1778 = vpow.pop %v1777
        %v1779 = vmul.f32 %v1681, 1.442695
        %v1780 = vpow.pop %v1779
        %v1781 = vmul.f32 %v1682, 1.442695
        %v1782 = vpow.pop %v1781
        %v1783 = vmul.f32 %v1683, 1.442695
        %v1784 = vpow.pop %v1783
        %v1785 = vmul.f32 %v1684, 1.442695
        %v1786 = vpow.pop %v1785
        %v1787 = vmul.f32 %v1685, 1.442695
        %v1788 = vpow.pop %v1787
        %v1789 = vmul.f32 %v1686, 1.442695
        %v1790 = vpow.pop %v1789
        %v1791 = vmul.f32 %v1687, 1.442695
        %v1792 = vpow.pop %v1791
        %v1793 = vmul.f32 %v1688, 1.442695
        %v1794 = vpow.pop %v1793
        %v1795 = vmul.f32 %v1689, 1.442695
        %v1796 = vpow.pop %v1795
        %v1797 = vmul.f32 %v1690, 1.442695
        %v1798 = vpow.pop %v1797
        %v1799 = vmul.f32 %v1691, 1.442695
        %v1800 = vpow.pop %v1799
        %v1801 = vmul.f32 %v1692, 1.442695
        %v1802 = vpow.pop %v1801
        %v1803 = vmul.f32 %v1693, 1.442695
        %v1804 = vpow.pop %v1803
        %v1805 = vmul.f32 %v1694, 1.442695
        %v1806 = vpow.pop %v1805
        %v1807 = vmul.f32 %v1695, 1.442695
        %v1808 = vpow.pop %v1807
        %v1809 = vmul.f32 %v1696, 1.442695
        %v1810 = vpow.pop %v1809
        %v1811 = vmul.f32 %v1697, 1.442695
        %v1812 = vpow.pop %v1811
        %v1813 = vmul.f32 %v1698, 1.442695
        %v1814 = vpow.pop %v1813
        %v1815 = vmul.f32 %v1699, 1.442695
        %v1816 = vpow.pop %v1815
        %v1817 = vmul.f32 %v1700, 1.442695
        %v1818 = vpow.pop %v1817
        %v1819 = vmul.f32 %v1701, 1.442695
        %v1820 = vpow.pop %v1819
        %v1821 = vmul.f32 %v1702, 1.442695
        %v1822 = vpow.pop %v1821
        %v1823 = vmul.f32 %v1703, 1.442695
        %v1824 = vpow.pop %v1823
        %v1825 = vmul.f32 %v1704, 1.442695
        %v1826 = vpow.pop %v1825
        %v1827 = vmul.f32 %v1705, 1.442695
        %v1828 = vpow.pop %v1827
        %v1829 = vmul.f32 %v1706, 1.442695
        %v1830 = vpow.pop %v1829
        %v1831 = vmul.f32 %v1707, 1.442695
        %v1832 = vpow.pop %v1831
        %v1833 = vmul.f32 %v1708, 1.442695
        %v1834 = vpow.pop %v1833
        %v1835 = vmul.f32 %v1709, 1.442695
        %v1836 = vpow.pop %v1835
        %v1837 = vmul.f32 %v1710, 1.442695
        %v1838 = vpow.pop %v1837
        %v1839 = vsel %vm1454, %v1712, 0.0
        %1840 = vadd.xlane.f32.xlu0 %v1839
        %v1841 = vpop.xlane.xlu0 %1840
        %v1842 = vsel %vm1454, %v1714, 0.0
        %1843 = vadd.xlane.f32.xlu0 %v1842
        %v1844 = vpop.xlane.xlu0 %1843
        %v1845 = vsel %vm1454, %v1716, 0.0
        %1846 = vadd.xlane.f32.xlu0 %v1845
        %v1847 = vpop.xlane.xlu0 %1846
        %v1848 = vsel %vm1454, %v1718, 0.0
        %1849 = vadd.xlane.f32.xlu0 %v1848
        %v1850 = vpop.xlane.xlu0 %1849
        %v1851 = vsel %vm1454, %v1720, 0.0
        %1852 = vadd.xlane.f32.xlu0 %v1851
        %v1853 = vpop.xlane.xlu0 %1852
        %v1854 = vsel %vm1454, %v1722, 0.0
        %1855 = vadd.xlane.f32.xlu0 %v1854
        %v1856 = vpop.xlane.xlu0 %1855
        %v1857 = vsel %vm1454, %v1724, 0.0
        %1858 = vadd.xlane.f32.xlu0 %v1857
        %v1859 = vpop.xlane.xlu0 %1858
        %v1860 = vsel %vm1454, %v1726, 0.0
        %1861 = vadd.xlane.f32.xlu0 %v1860
        %v1862 = vpop.xlane.xlu0 %1861
        %v1863 = vsel %vm1454, %v1728, 0.0
        %1864 = vadd.xlane.f32.xlu0 %v1863
        %v1865 = vpop.xlane.xlu0 %1864
        %v1866 = vsel %vm1454, %v1730, 0.0
        %1867 = vadd.xlane.f32.xlu0 %v1866
        %v1868 = vpop.xlane.xlu0 %1867
        %v1869 = vsel %vm1454, %v1732, 0.0
        %1870 = vadd.xlane.f32.xlu0 %v1869
        %v1871 = vpop.xlane.xlu0 %1870
        %v1872 = vsel %vm1454, %v1734, 0.0
        %1873 = vadd.xlane.f32.xlu0 %v1872
        %v1874 = vpop.xlane.xlu0 %1873
        %v1875 = vsel %vm1454, %v1736, 0.0
        %1876 = vadd.xlane.f32.xlu0 %v1875
        %v1877 = vpop.xlane.xlu0 %1876
        %v1878 = vsel %vm1454, %v1738, 0.0
        %1879 = vadd.xlane.f32.xlu0 %v1878
        %v1880 = vpop.xlane.xlu0 %1879
        %v1881 = vsel %vm1454, %v1740, 0.0
        %1882 = vadd.xlane.f32.xlu0 %v1881
        %v1883 = vpop.xlane.xlu0 %1882
        %v1884 = vsel %vm1454, %v1742, 0.0
        %1885 = vadd.xlane.f32.xlu0 %v1884
        %v1886 = vpop.xlane.xlu0 %1885
        %v1887 = vsel %vm1454, %v1744, 0.0
        %1888 = vadd.xlane.f32.xlu0 %v1887
        %v1889 = vpop.xlane.xlu0 %1888
        %v1890 = vsel %vm1454, %v1746, 0.0
        %1891 = vadd.xlane.f32.xlu0 %v1890
        %v1892 = vpop.xlane.xlu0 %1891
        %v1893 = vsel %vm1454, %v1748, 0.0
        %1894 = vadd.xlane.f32.xlu0 %v1893
        %v1895 = vpop.xlane.xlu0 %1894
        %v1896 = vsel %vm1454, %v1750, 0.0
        %1897 = vadd.xlane.f32.xlu0 %v1896
        %v1898 = vpop.xlane.xlu0 %1897
        %v1899 = vsel %vm1454, %v1752, 0.0
        %1900 = vadd.xlane.f32.xlu0 %v1899
        %v1901 = vpop.xlane.xlu0 %1900
        %v1902 = vsel %vm1454, %v1754, 0.0
        %1903 = vadd.xlane.f32.xlu0 %v1902
        %v1904 = vpop.xlane.xlu0 %1903
        %v1905 = vsel %vm1454, %v1756, 0.0
        %1906 = vadd.xlane.f32.xlu0 %v1905
        %v1907 = vpop.xlane.xlu0 %1906
        %v1908 = vsel %vm1454, %v1758, 0.0
        %1909 = vadd.xlane.f32.xlu0 %v1908
        %v1910 = vpop.xlane.xlu0 %1909
        %v1911 = vsel %vm1454, %v1760, 0.0
        %1912 = vadd.xlane.f32.xlu0 %v1911
        %v1913 = vpop.xlane.xlu0 %1912
        %v1914 = vsel %vm1454, %v1762, 0.0
        %1915 = vadd.xlane.f32.xlu0 %v1914
        %v1916 = vpop.xlane.xlu0 %1915
        %v1917 = vsel %vm1454, %v1764, 0.0
        %1918 = vadd.xlane.f32.xlu0 %v1917
        %v1919 = vpop.xlane.xlu0 %1918
        %v1920 = vsel %vm1454, %v1766, 0.0
        %1921 = vadd.xlane.f32.xlu0 %v1920
        %v1922 = vpop.xlane.xlu0 %1921
        %v1923 = vsel %vm1454, %v1768, 0.0
        %1924 = vadd.xlane.f32.xlu0 %v1923
        %v1925 = vpop.xlane.xlu0 %1924
        %v1926 = vsel %vm1454, %v1770, 0.0
        %1927 = vadd.xlane.f32.xlu0 %v1926
        %v1928 = vpop.xlane.xlu0 %1927
        %v1929 = vsel %vm1454, %v1772, 0.0
        %1930 = vadd.xlane.f32.xlu0 %v1929
        %v1931 = vpop.xlane.xlu0 %1930
        %v1932 = vsel %vm1454, %v1774, 0.0
        %1933 = vadd.xlane.f32.xlu0 %v1932
        %v1934 = vpop.xlane.xlu0 %1933
        %v1935 = vsel %vm1454, %v1776, 0.0
        %1936 = vadd.xlane.f32.xlu0 %v1935
        %v1937 = vpop.xlane.xlu0 %1936
        %v1938 = vsel %vm1454, %v1778, 0.0
        %1939 = vadd.xlane.f32.xlu0 %v1938
        %v1940 = vpop.xlane.xlu0 %1939
        %v1941 = vsel %vm1454, %v1780, 0.0
        %1942 = vadd.xlane.f32.xlu0 %v1941
        %v1943 = vpop.xlane.xlu0 %1942
        %v1944 = vsel %vm1454, %v1782, 0.0
        %1945 = vadd.xlane.f32.xlu0 %v1944
        %v1946 = vpop.xlane.xlu0 %1945
        %v1947 = vsel %vm1454, %v1784, 0.0
        %1948 = vadd.xlane.f32.xlu0 %v1947
        %v1949 = vpop.xlane.xlu0 %1948
        %v1950 = vsel %vm1454, %v1786, 0.0
        %1951 = vadd.xlane.f32.xlu0 %v1950
        %v1952 = vpop.xlane.xlu0 %1951
        %v1953 = vsel %vm1454, %v1788, 0.0
        %1954 = vadd.xlane.f32.xlu0 %v1953
        %v1955 = vpop.xlane.xlu0 %1954
        %v1956 = vsel %vm1454, %v1790, 0.0
        %1957 = vadd.xlane.f32.xlu0 %v1956
        %v1958 = vpop.xlane.xlu0 %1957
        %v1959 = vsel %vm1454, %v1792, 0.0
        %1960 = vadd.xlane.f32.xlu0 %v1959
        %v1961 = vpop.xlane.xlu0 %1960
        %v1962 = vsel %vm1454, %v1794, 0.0
        %1963 = vadd.xlane.f32.xlu0 %v1962
        %v1964 = vpop.xlane.xlu0 %1963
        %v1965 = vsel %vm1454, %v1796, 0.0
        %1966 = vadd.xlane.f32.xlu0 %v1965
        %v1967 = vpop.xlane.xlu0 %1966
        %v1968 = vsel %vm1454, %v1798, 0.0
        %1969 = vadd.xlane.f32.xlu0 %v1968
        %v1970 = vpop.xlane.xlu0 %1969
        %v1971 = vsel %vm1454, %v1800, 0.0
        %1972 = vadd.xlane.f32.xlu0 %v1971
        %v1973 = vpop.xlane.xlu0 %1972
        %v1974 = vsel %vm1454, %v1802, 0.0
        %1975 = vadd.xlane.f32.xlu0 %v1974
        %v1976 = vpop.xlane.xlu0 %1975
        %v1977 = vsel %vm1454, %v1804, 0.0
        %1978 = vadd.xlane.f32.xlu0 %v1977
        %v1979 = vpop.xlane.xlu0 %1978
        %v1980 = vsel %vm1454, %v1806, 0.0
        %1981 = vadd.xlane.f32.xlu0 %v1980
        %v1982 = vpop.xlane.xlu0 %1981
        %v1983 = vsel %vm1454, %v1808, 0.0
        %1984 = vadd.xlane.f32.xlu0 %v1983
        %v1985 = vpop.xlane.xlu0 %1984
        %v1986 = vsel %vm1454, %v1810, 0.0
        %1987 = vadd.xlane.f32.xlu0 %v1986
        %v1988 = vpop.xlane.xlu0 %1987
        %v1989 = vsel %vm1454, %v1812, 0.0
        %1990 = vadd.xlane.f32.xlu0 %v1989
        %v1991 = vpop.xlane.xlu0 %1990
        %v1992 = vsel %vm1454, %v1814, 0.0
        %1993 = vadd.xlane.f32.xlu0 %v1992
        %v1994 = vpop.xlane.xlu0 %1993
        %v1995 = vsel %vm1454, %v1816, 0.0
        %1996 = vadd.xlane.f32.xlu0 %v1995
        %v1997 = vpop.xlane.xlu0 %1996
        %v1998 = vsel %vm1454, %v1818, 0.0
        %1999 = vadd.xlane.f32.xlu0 %v1998
        %v2000 = vpop.xlane.xlu0 %1999
        %v2001 = vsel %vm1454, %v1820, 0.0
        %2002 = vadd.xlane.f32.xlu0 %v2001
        %v2003 = vpop.xlane.xlu0 %2002
        %v2004 = vsel %vm1454, %v1822, 0.0
        %2005 = vadd.xlane.f32.xlu0 %v2004
        %v2006 = vpop.xlane.xlu0 %2005
        %v2007 = vsel %vm1454, %v1824, 0.0
        %2008 = vadd.xlane.f32.xlu0 %v2007
        %v2009 = vpop.xlane.xlu0 %2008
        %v2010 = vsel %vm1454, %v1826, 0.0
        %2011 = vadd.xlane.f32.xlu0 %v2010
        %v2012 = vpop.xlane.xlu0 %2011
        %v2013 = vsel %vm1454, %v1828, 0.0
        %2014 = vadd.xlane.f32.xlu0 %v2013
        %v2015 = vpop.xlane.xlu0 %2014
        %v2016 = vsel %vm1454, %v1830, 0.0
        %2017 = vadd.xlane.f32.xlu0 %v2016
        %v2018 = vpop.xlane.xlu0 %2017
        %v2019 = vsel %vm1454, %v1832, 0.0
        %2020 = vadd.xlane.f32.xlu0 %v2019
        %v2021 = vpop.xlane.xlu0 %2020
        %v2022 = vsel %vm1454, %v1834, 0.0
        %2023 = vadd.xlane.f32.xlu0 %v2022
        %v2024 = vpop.xlane.xlu0 %2023
        %v2025 = vsel %vm1454, %v1836, 0.0
        %2026 = vadd.xlane.f32.xlu0 %v2025
        %v2027 = vpop.xlane.xlu0 %2026
        %v2028 = vsel %vm1454, %v1838, 0.0
        %2029 = vadd.xlane.f32.xlu0 %v2028
        %v2030 = vpop.xlane.xlu0 %2029
        %v2031 = vlog2.pop %v1841
        %v2032 = vmul.f32 %v2031, 0.6931472
        %v2033 = vlog2.pop %v1844
        %v2034 = vmul.f32 %v2033, 0.6931472
        %v2035 = vlog2.pop %v1847
        %v2036 = vmul.f32 %v2035, 0.6931472
        %v2037 = vlog2.pop %v1850
        %v2038 = vmul.f32 %v2037, 0.6931472
        %v2039 = vlog2.pop %v1853
        %v2040 = vmul.f32 %v2039, 0.6931472
        %v2041 = vlog2.pop %v1856
        %v2042 = vmul.f32 %v2041, 0.6931472
        %v2043 = vlog2.pop %v1859
        %v2044 = vmul.f32 %v2043, 0.6931472
        %v2045 = vlog2.pop %v1862
        %v2046 = vmul.f32 %v2045, 0.6931472
        %v2047 = vlog2.pop %v1865
        %v2048 = vmul.f32 %v2047, 0.6931472
        %v2049 = vlog2.pop %v1868
        %v2050 = vmul.f32 %v2049, 0.6931472
        %v2051 = vlog2.pop %v1871
        %v2052 = vmul.f32 %v2051, 0.6931472
        %v2053 = vlog2.pop %v1874
        %v2054 = vmul.f32 %v2053, 0.6931472
        %v2055 = vlog2.pop %v1877
        %v2056 = vmul.f32 %v2055, 0.6931472
        %v2057 = vlog2.pop %v1880
        %v2058 = vmul.f32 %v2057, 0.6931472
        %v2059 = vlog2.pop %v1883
        %v2060 = vmul.f32 %v2059, 0.6931472
        %v2061 = vlog2.pop %v1886
        %v2062 = vmul.f32 %v2061, 0.6931472
        %v2063 = vlog2.pop %v1889
        %v2064 = vmul.f32 %v2063, 0.6931472
        %v2065 = vlog2.pop %v1892
        %v2066 = vmul.f32 %v2065, 0.6931472
        %v2067 = vlog2.pop %v1895
        %v2068 = vmul.f32 %v2067, 0.6931472
        %v2069 = vlog2.pop %v1898
        %v2070 = vmul.f32 %v2069, 0.6931472
        %v2071 = vlog2.pop %v1901
        %v2072 = vmul.f32 %v2071, 0.6931472
        %v2073 = vlog2.pop %v1904
        %v2074 = vmul.f32 %v2073, 0.6931472
        %v2075 = vlog2.pop %v1907
        %v2076 = vmul.f32 %v2075, 0.6931472
        %v2077 = vlog2.pop %v1910
        %v2078 = vmul.f32 %v2077, 0.6931472
        %v2079 = vlog2.pop %v1913
        %v2080 = vmul.f32 %v2079, 0.6931472
        %v2081 = vlog2.pop %v1916
        %v2082 = vmul.f32 %v2081, 0.6931472
        %v2083 = vlog2.pop %v1919
        %v2084 = vmul.f32 %v2083, 0.6931472
        %v2085 = vlog2.pop %v1922
        %v2086 = vmul.f32 %v2085, 0.6931472
        %v2087 = vlog2.pop %v1925
        %v2088 = vmul.f32 %v2087, 0.6931472
        %v2089 = vlog2.pop %v1928
        %v2090 = vmul.f32 %v2089, 0.6931472
        %v2091 = vlog2.pop %v1931
        %v2092 = vmul.f32 %v2091, 0.6931472
        %v2093 = vlog2.pop %v1934
        %v2094 = vmul.f32 %v2093, 0.6931472
        %v2095 = vlog2.pop %v1937
        %v2096 = vmul.f32 %v2095, 0.6931472
        %v2097 = vlog2.pop %v1940
        %v2098 = vmul.f32 %v2097, 0.6931472
        %v2099 = vlog2.pop %v1943
        %v2100 = vmul.f32 %v2099, 0.6931472
        %v2101 = vlog2.pop %v1946
        %v2102 = vmul.f32 %v2101, 0.6931472
        %v2103 = vlog2.pop %v1949
        %v2104 = vmul.f32 %v2103, 0.6931472
        %v2105 = vlog2.pop %v1952
        %v2106 = vmul.f32 %v2105, 0.6931472
        %v2107 = vlog2.pop %v1955
        %v2108 = vmul.f32 %v2107, 0.6931472
        %v2109 = vlog2.pop %v1958
        %v2110 = vmul.f32 %v2109, 0.6931472
        %v2111 = vlog2.pop %v1961
        %v2112 = vmul.f32 %v2111, 0.6931472
        %v2113 = vlog2.pop %v1964
        %v2114 = vmul.f32 %v2113, 0.6931472
        %v2115 = vlog2.pop %v1967
        %v2116 = vmul.f32 %v2115, 0.6931472
        %v2117 = vlog2.pop %v1970
        %v2118 = vmul.f32 %v2117, 0.6931472
        %v2119 = vlog2.pop %v1973
        %v2120 = vmul.f32 %v2119, 0.6931472
        %v2121 = vlog2.pop %v1976
        %v2122 = vmul.f32 %v2121, 0.6931472
        %v2123 = vlog2.pop %v1979
        %v2124 = vmul.f32 %v2123, 0.6931472
        %v2125 = vlog2.pop %v1982
        %v2126 = vmul.f32 %v2125, 0.6931472
        %v2127 = vlog2.pop %v1985
        %v2128 = vmul.f32 %v2127, 0.6931472
        %v2129 = vlog2.pop %v1988
        %v2130 = vmul.f32 %v2129, 0.6931472
        %v2131 = vlog2.pop %v1991
        %v2132 = vmul.f32 %v2131, 0.6931472
        %v2133 = vlog2.pop %v1994
        %v2134 = vmul.f32 %v2133, 0.6931472
        %v2135 = vlog2.pop %v1997
        %v2136 = vmul.f32 %v2135, 0.6931472
        %v2137 = vlog2.pop %v2000
        %v2138 = vmul.f32 %v2137, 0.6931472
        %v2139 = vlog2.pop %v2003
        %v2140 = vmul.f32 %v2139, 0.6931472
        %v2141 = vlog2.pop %v2006
        %v2142 = vmul.f32 %v2141, 0.6931472
        %v2143 = vlog2.pop %v2009
        %v2144 = vmul.f32 %v2143, 0.6931472
        %v2145 = vlog2.pop %v2012
        %v2146 = vmul.f32 %v2145, 0.6931472
        %v2147 = vlog2.pop %v2015
        %v2148 = vmul.f32 %v2147, 0.6931472
        %v2149 = vlog2.pop %v2018
        %v2150 = vmul.f32 %v2149, 0.6931472
        %v2151 = vlog2.pop %v2021
        %v2152 = vmul.f32 %v2151, 0.6931472
        %v2153 = vlog2.pop %v2024
        %v2154 = vmul.f32 %v2153, 0.6931472
        %v2155 = vlog2.pop %v2027
        %v2156 = vmul.f32 %v2155, 0.6931472
        %v2157 = vlog2.pop %v2030
        %v2158 = vmul.f32 %v2157, 0.6931472
        %v2159 = vsub.f32 %v1647, %v2032
        %v2160 = vsub.f32 %v1648, %v2034
        %v2161 = vsub.f32 %v1649, %v2036
        %v2162 = vsub.f32 %v1650, %v2038
        %v2163 = vsub.f32 %v1651, %v2040
        %v2164 = vsub.f32 %v1652, %v2042
        %v2165 = vsub.f32 %v1653, %v2044
        %v2166 = vsub.f32 %v1654, %v2046
        %v2167 = vsub.f32 %v1655, %v2048
        %v2168 = vsub.f32 %v1656, %v2050
        %v2169 = vsub.f32 %v1657, %v2052
        %v2170 = vsub.f32 %v1658, %v2054
        %v2171 = vsub.f32 %v1659, %v2056
        %v2172 = vsub.f32 %v1660, %v2058
        %v2173 = vsub.f32 %v1661, %v2060
        %v2174 = vsub.f32 %v1662, %v2062
        %v2175 = vsub.f32 %v1663, %v2064
        %v2176 = vsub.f32 %v1664, %v2066
        %v2177 = vsub.f32 %v1665, %v2068
        %v2178 = vsub.f32 %v1666, %v2070
        %v2179 = vsub.f32 %v1667, %v2072
        %v2180 = vsub.f32 %v1668, %v2074
        %v2181 = vsub.f32 %v1669, %v2076
        %v2182 = vsub.f32 %v1670, %v2078
        %v2183 = vsub.f32 %v1671, %v2080
        %v2184 = vsub.f32 %v1672, %v2082
        %v2185 = vsub.f32 %v1673, %v2084
        %v2186 = vsub.f32 %v1674, %v2086
        %v2187 = vsub.f32 %v1675, %v2088
        %v2188 = vsub.f32 %v1676, %v2090
        %v2189 = vsub.f32 %v1677, %v2092
        %v2190 = vsub.f32 %v1678, %v2094
        %v2191 = vsub.f32 %v1679, %v2096
        %v2192 = vsub.f32 %v1680, %v2098
        %v2193 = vsub.f32 %v1681, %v2100
        %v2194 = vsub.f32 %v1682, %v2102
        %v2195 = vsub.f32 %v1683, %v2104
        %v2196 = vsub.f32 %v1684, %v2106
        %v2197 = vsub.f32 %v1685, %v2108
        %v2198 = vsub.f32 %v1686, %v2110
        %v2199 = vsub.f32 %v1687, %v2112
        %v2200 = vsub.f32 %v1688, %v2114
        %v2201 = vsub.f32 %v1689, %v2116
        %v2202 = vsub.f32 %v1690, %v2118
        %v2203 = vsub.f32 %v1691, %v2120
        %v2204 = vsub.f32 %v1692, %v2122
        %v2205 = vsub.f32 %v1693, %v2124
        %v2206 = vsub.f32 %v1694, %v2126
        %v2207 = vsub.f32 %v1695, %v2128
        %v2208 = vsub.f32 %v1696, %v2130
        %v2209 = vsub.f32 %v1697, %v2132
        %v2210 = vsub.f32 %v1698, %v2134
        %v2211 = vsub.f32 %v1699, %v2136
        %v2212 = vsub.f32 %v1700, %v2138
        %v2213 = vsub.f32 %v1701, %v2140
        %v2214 = vsub.f32 %v1702, %v2142
        %v2215 = vsub.f32 %v1703, %v2144
        %v2216 = vsub.f32 %v1704, %v2146
        %v2217 = vsub.f32 %v1705, %v2148
        %v2218 = vsub.f32 %v1706, %v2150
        %v2219 = vsub.f32 %v1707, %v2152
        %v2220 = vsub.f32 %v1708, %v2154
        %v2221 = vsub.f32 %v1709, %v2156
        %v2222 = vsub.f32 %v1710, %v2158
        %2223 = vst.msk [vmem:[%s265] sm:$0xff] %vm1454, %v2159
        %2224 = vst.msk [vmem:[%s265 + $0x8] sm:$0xff] %vm1454, %v2160
        %2225 = vst.msk [vmem:[%s265 + $0x10] sm:$0xff] %vm1454, %v2161
        %2226 = vst.msk [vmem:[%s265 + $0x18] sm:$0xff] %vm1454, %v2162
        %2227 = vst.msk [vmem:[%s265 + $0x20] sm:$0xff] %vm1454, %v2163
        %2228 = vst.msk [vmem:[%s265 + $0x28] sm:$0xff] %vm1454, %v2164
        %2229 = vst.msk [vmem:[%s265 + $0x30] sm:$0xff] %vm1454, %v2165
        %2230 = vst.msk [vmem:[%s265 + $0x38] sm:$0xff] %vm1454, %v2166
        %2231 = vst.msk [vmem:[%s265 + $0x40] sm:$0xff] %vm1454, %v2167
        %2232 = vst.msk [vmem:[%s265 + $0x48] sm:$0xff] %vm1454, %v2168
        %2233 = vst.msk [vmem:[%s265 + $0x50] sm:$0xff] %vm1454, %v2169
        %2234 = vst.msk [vmem:[%s265 + $0x58] sm:$0xff] %vm1454, %v2170
        %2235 = vst.msk [vmem:[%s265 + $0x60] sm:$0xff] %vm1454, %v2171
        %2236 = vst.msk [vmem:[%s265 + $0x68] sm:$0xff] %vm1454, %v2172
        %2237 = vst.msk [vmem:[%s265 + $0x70] sm:$0xff] %vm1454, %v2173
        %2238 = vst.msk [vmem:[%s265 + $0x78] sm:$0xff] %vm1454, %v2174
        %2239 = vst.msk [vmem:[%s265 + $0x80] sm:$0xff] %vm1454, %v2175
        %2240 = vst.msk [vmem:[%s265 + $0x88] sm:$0xff] %vm1454, %v2176
        %2241 = vst.msk [vmem:[%s265 + $0x90] sm:$0xff] %vm1454, %v2177
        %2242 = vst.msk [vmem:[%s265 + $0x98] sm:$0xff] %vm1454, %v2178
        %2243 = vst.msk [vmem:[%s265 + $0xa0] sm:$0xff] %vm1454, %v2179
        %2244 = vst.msk [vmem:[%s265 + $0xa8] sm:$0xff] %vm1454, %v2180
        %2245 = vst.msk [vmem:[%s265 + $0xb0] sm:$0xff] %vm1454, %v2181
        %2246 = vst.msk [vmem:[%s265 + $0xb8] sm:$0xff] %vm1454, %v2182
        %2247 = vst.msk [vmem:[%s265 + $0xc0] sm:$0xff] %vm1454, %v2183
        %2248 = vst.msk [vmem:[%s265 + $0xc8] sm:$0xff] %vm1454, %v2184
        %2249 = vst.msk [vmem:[%s265 + $0xd0] sm:$0xff] %vm1454, %v2185
        %2250 = vst.msk [vmem:[%s265 + $0xd8] sm:$0xff] %vm1454, %v2186
        %2251 = vst.msk [vmem:[%s265 + $0xe0] sm:$0xff] %vm1454, %v2187
        %2252 = vst.msk [vmem:[%s265 + $0xe8] sm:$0xff] %vm1454, %v2188
        %2253 = vst.msk [vmem:[%s265 + $0xf0] sm:$0xff] %vm1454, %v2189
        %2254 = vst.msk [vmem:[%s265 + $0xf8] sm:$0xff] %vm1454, %v2190
        %2255 = vst.msk [vmem:[%s265 + $0x100] sm:$0xff] %vm1454, %v2191
        %2256 = vst.msk [vmem:[%s265 + $0x108] sm:$0xff] %vm1454, %v2192
        %2257 = vst.msk [vmem:[%s265 + $0x110] sm:$0xff] %vm1454, %v2193
        %2258 = vst.msk [vmem:[%s265 + $0x118] sm:$0xff] %vm1454, %v2194
        %2259 = vst.msk [vmem:[%s265 + $0x120] sm:$0xff] %vm1454, %v2195
        %2260 = vst.msk [vmem:[%s265 + $0x128] sm:$0xff] %vm1454, %v2196
        %2261 = vst.msk [vmem:[%s265 + $0x130] sm:$0xff] %vm1454, %v2197
        %2262 = vst.msk [vmem:[%s265 + $0x138] sm:$0xff] %vm1454, %v2198
        %2263 = vst.msk [vmem:[%s265 + $0x140] sm:$0xff] %vm1454, %v2199
        %2264 = vst.msk [vmem:[%s265 + $0x148] sm:$0xff] %vm1454, %v2200
        %2265 = vst.msk [vmem:[%s265 + $0x150] sm:$0xff] %vm1454, %v2201
        %2266 = vst.msk [vmem:[%s265 + $0x158] sm:$0xff] %vm1454, %v2202
        %2267 = vst.msk [vmem:[%s265 + $0x160] sm:$0xff] %vm1454, %v2203
        %2268 = vst.msk [vmem:[%s265 + $0x168] sm:$0xff] %vm1454, %v2204
        %2269 = vst.msk [vmem:[%s265 + $0x170] sm:$0xff] %vm1454, %v2205
        %2270 = vst.msk [vmem:[%s265 + $0x178] sm:$0xff] %vm1454, %v2206
        %2271 = vst.msk [vmem:[%s265 + $0x180] sm:$0xff] %vm1454, %v2207
        %2272 = vst.msk [vmem:[%s265 + $0x188] sm:$0xff] %vm1454, %v2208
        %2273 = vst.msk [vmem:[%s265 + $0x190] sm:$0xff] %vm1454, %v2209
        %2274 = vst.msk [vmem:[%s265 + $0x198] sm:$0xff] %vm1454, %v2210
        %2275 = vst.msk [vmem:[%s265 + $0x1a0] sm:$0xff] %vm1454, %v2211
        %2276 = vst.msk [vmem:[%s265 + $0x1a8] sm:$0xff] %vm1454, %v2212
        %2277 = vst.msk [vmem:[%s265 + $0x1b0] sm:$0xff] %vm1454, %v2213
        %2278 = vst.msk [vmem:[%s265 + $0x1b8] sm:$0xff] %vm1454, %v2214
        %2279 = vst.msk [vmem:[%s265 + $0x1c0] sm:$0xff] %vm1454, %v2215
        %2280 = vst.msk [vmem:[%s265 + $0x1c8] sm:$0xff] %vm1454, %v2216
        %2281 = vst.msk [vmem:[%s265 + $0x1d0] sm:$0xff] %vm1454, %v2217
        %2282 = vst.msk [vmem:[%s265 + $0x1d8] sm:$0xff] %vm1454, %v2218
        %2283 = vst.msk [vmem:[%s265 + $0x1e0] sm:$0xff] %vm1454, %v2219
        %2284 = vst.msk [vmem:[%s265 + $0x1e8] sm:$0xff] %vm1454, %v2220
        %2285 = vst.msk [vmem:[%s265 + $0x1f0] sm:$0xff] %vm1454, %v2221
        %2286 = vst.msk [vmem:[%s265 + $0x1f8] sm:$0xff] %vm1454, %v2222
        %s2287 = smul.u32 64, %s20
        %p2288 = scmp.lt.s32.totalorder %s2287, 127
        %s2289 = scalar_select %p2288, %s2287, 127
        %s2290 = smul.addr %s2289, 8
        %s2291 = scalar_lea.vmem %s5, %s2290
        // Predicated region
        $region49: #{tpu_custom_call.1} parent=39 // pred_check
          %p2292 = pneg %p148
        $region50: #{tpu_custom_call.1} parent=39 // pred_check_branch
          %2294 = sbr.rel (%p2292) target = $region52
        $region51: #{tpu_custom_call.1} parent=39 // pred_region
          %s2295 = smul.u32 64, %s20
        $region52: #{tpu_custom_call.1} parent=39 // pred_fallthru
          _
      $region40: #{tpu_custom_call.1} parent=5 // pred_fallthru
        _
      %p2296 = scmp.le.s32.totalorder 2, %s15
      // Predicated region
      $region53: #{tpu_custom_call.1} parent=5 // pred_check
        %p2297 = pneg %p2296
      $region54: #{tpu_custom_call.1} parent=5 // pred_check_branch
        %2299 = sbr.rel (%p2297) target = $region56
      $region55: #{tpu_custom_call.1} parent=5 // pred_region
        %s2300 = ssub.s32 %s15, 2
        // Predicated region
        $region57: #{tpu_custom_call.1} parent=55 // pred_check
          %p2301 = pneg %p154
        $region58: #{tpu_custom_call.1} parent=55 // pred_check_branch
          %2303 = sbr.rel (%p2301) target = $region60
        $region59: #{tpu_custom_call.1} parent=55 // pred_region
          %s2304 = smul.u32 64, %s21
          %p2305 = scmp.lt.s32.totalorder %s2304, 127
          %s2306 = scalar_select %p2305, %s2304, 127
          %s2307 = smul.addr %s2306, 8
          %s2308 = scalar_lea.vmem %s5, %s2307
        $region60: #{tpu_custom_call.1} parent=55 // pred_fallthru
          _
      $region56: #{tpu_custom_call.1} parent=5 // pred_fallthru
        _
    $region6: #{tpu_custom_call.1} parent=1 // loop_footer
      %s19 = sadd.s32 1, %s15
    $region7: #{tpu_custom_call.1} parent=1 // loop_footer_branch
      %14 = sbr.rel target = $region3
    $region8: #{tpu_custom_call.1} parent=1 // loop_exit
      _
    %2309 = vsyncpa [#allocation3], 1
    %s2310 = scalar_lea.sflag [#allocation3], 1
    %2311 = vsyncpa %s2310, 1
    %2312 = vsyncpa [#allocation5], 1

</llo_original>
